<compile_context>
chip_gen: v7x
topology: tpu7x:2x2x1
jax: 0.10.0
libtpu: 0.0.40
codegen_flags: <defaults>
</compile_context>

<pallas_src>
import math

import jax
import jax.numpy as jnp
from jax.experimental import pallas as pl
from jax.experimental.pallas import tpu as pltpu

_RHO_UNIT = float(math.log(math.e - 1.0))  # softplus(_RHO_UNIT) == 1  =>  log(std) == 0


def _round_up(a, m):
    return (a + m - 1) // m * m


def _softplus(z):
    # Numerically stable log(1 + exp(z)) (one exp + one log on the EUP).
    return jnp.maximum(z, 0.0) + jnp.log(1.0 + jnp.exp(-jnp.abs(z)))


def _radial_kernel(x_ref, wp_ref, weps_ref, winv_ref, bp_ref,   # inputs
                   y_ref, kl_ref,                               # outputs
                   acc_ref, klrow_ref):                         # scratch
    """One (N-tile, K-tile) grid step.  Grid = (out tiles [parallel], in tiles [arbitrary]).

      x_ref    : (B, tk)      f32   activations (K slice)
      wp_ref   : (2, tk, tn)  bf16  packed [w_mu, w_rho] tile
      weps_ref : (tk, tn)     bf16  epsilon sample tile
      winv_ref : (tk, 1)      f32   w_r / ||eps_row||  (precomputed per K row)
      bp_ref   : (3, tn)      f32   packed [bias_mu, bias_rho, bias_eps * bias_r / ||bias_eps||]
      y_ref    : (B, tn)      f32   output tile (resident across K)
      kl_ref   : (1, 8, 128)  f32   per-N-tile KL partial (scalar broadcast, unmasked store)
      acc_ref  : (B, tn)      f32   matmul accumulator
      klrow_ref: (1, tn)      f32   KL row accumulator (lane-reduced once at the end)
    """
    k = pl.program_id(1)
    f32 = jnp.float32

    @pl.when(k == 0)
    def _():
        acc_ref[...] = jnp.zeros_like(acc_ref)
        klrow_ref[...] = jnp.zeros_like(klrow_ref)

    # ---- weight construction (all elementwise math in f32) -------------------
    w_mu = wp_ref[0].astype(f32)
    w_rho = wp_ref[1].astype(f32)
    w_eps = weps_ref[...].astype(f32)
    w_std = _softplus(w_rho)
    # winv already folds the radial scalar r and 1/||eps|| over the out axis.
    w = w_mu + w_std * (w_eps * winv_ref[...])                       # (tk, tn)

    # ---- y += x @ w  (bf16 MXU path, f32 accumulation) -----------------------
    acc_ref[...] += jnp.dot(x_ref[...].astype(jnp.bfloat16),
                            w.astype(jnp.bfloat16),
                            preferred_element_type=f32)

    # ---- KL partials ----------------------------------------------------------
    # Padded cells contribute ~0: mu = eps = 0 and rho = softplus^-1(1); the tiny
    # bf16-rounding residual of the rho pad is removed by a static offset in the
    # wrapper.  Sublane (K) reduce per step; the lane reduce runs once per N tile.
    # TODO(synk): if v7x turns EUP-bound after the DMA fixes, fold jnp.log(w_std)
    # into the softplus pieces to shave one transcendental per element.
    klrow_ref[...] += jnp.sum(0.5 * w * w - jnp.log(w_std), axis=0, keepdims=True)

    @pl.when(k == pl.num_programs(1) - 1)
    def _():
        b_mu = bp_ref[0:1, :]
        b_rho = bp_ref[1:2, :]
        b_eps = bp_ref[2:3, :]                      # already normalised * bias_r
        b_std = _softplus(b_rho)
        bias = b_mu + b_std * b_eps                 # (1, tn)
        y_ref[...] = (acc_ref[...] + bias).astype(y_ref.dtype)
        row = klrow_ref[...] + 0.5 * bias * bias - jnp.log(b_std)
        kl_ref[...] = jnp.broadcast_to(jnp.sum(row, keepdims=True), kl_ref.shape)


def make_radial_layer(w_mu, w_rho, bias_mu, bias_rho, *,
                      tile_k=512, tile_n=512, weight_dtype=jnp.bfloat16):
    """Builds (params, forward) for a RadialLayer.

    Parameters are re-laid-out ONCE here (torch (Out, In) -> MXU-native
    (In_pad, Out_pad), mu/rho packed, bf16 storage); the returned `forward`
    never re-reads / re-writes them in HBM per call.
    """
    out_features, in_features = w_mu.shape
    f32 = jnp.float32

    tk = min(int(tile_k), _round_up(in_features, 128))
    tn = min(int(tile_n), _round_up(out_features, 128))
    in_pad = _round_up(in_features, tk)
    out_pad = _round_up(out_features, tn)
    n_k = in_pad // tk
    n_n = out_pad // tn

    # ---- one-time parameter re-layout (init cost, not per-call) --------------
    def _prep_w(a, fill):
        a = jnp.asarray(a, f32).T                                  # (In, Out)
        return jnp.pad(a, ((0, in_pad - in_features), (0, out_pad - out_features)),
                       constant_values=fill)

    w_params = jnp.stack([_prep_w(w_mu, 0.0),
                          _prep_w(w_rho, _RHO_UNIT)]).astype(weight_dtype)

    def _prep_brow(v, fill):
        v = jnp.asarray(v, f32).reshape(1, out_features)
        return jnp.pad(v, ((0, 0), (0, out_pad - out_features)), constant_values=fill)

    params = dict(w_params=w_params,                               # (2, In_pad, Out_pad) bf16
                  b_mu=_prep_brow(bias_mu, 0.0),                   # (1, Out_pad) f32
                  b_rho=_prep_brow(bias_rho, _RHO_UNIT))           # (1, Out_pad) f32

    # ---- static KL offset: prior constant + padded-cell entropy correction ---
    # TODO(synk): Gaussian(0,1).log_likelihood is assumed to be the summed
    # standard-normal log-pdf (the Gaussian class is not given in the spec).
    prior_const = ((out_features * in_features + out_features)
                   * 0.5 * math.log(2.0 * math.pi))
    c_pad_w = float(jnp.log(_softplus(
        jnp.asarray(_RHO_UNIT, dtype=weight_dtype).astype(f32))))
    c_pad_b = float(jnp.log(_softplus(jnp.float32(_RHO_UNIT))))
    n_pad_w = in_pad * out_pad - in_features * out_features
    n_pad_b = out_pad - out_features
    kl_offset = prior_const + n_pad_w * c_pad_w + n_pad_b * c_pad_b

    w_bytes = int(jnp.dtype(weight_dtype).itemsize)

    @jax.jit
    def forward(params, x, w_eps, bias_eps, w_r, bias_r):
        """Forward pass.  Returns (y, kl_divergence).

          x        : (B, in_features)
          w_eps    : (in_features, out_features)   epsilon sample ~ N(0, 0.5)
          bias_eps : (out_features,)               epsilon sample ~ N(0, 0.5)
          w_r, bias_r : (1,) or ()                 radial scalars ~ N(0, 1)
        """
        B = x.shape[0]
        x_p = jnp.pad(x.astype(f32), ((0, 0), (0, in_pad - in_features)))

        # In production the sample should be drawn directly in this padded bf16
        # layout (inside the same jit) so this pad/cast pass disappears.
        eps_p = jnp.pad(jnp.asarray(w_eps, f32),
                        ((0, in_pad - in_features), (0, out_pad - out_features))
                        ).astype(weight_dtype)
        eps_f = eps_p.astype(f32)
        # Per-K-row inverse eps norm over the out axis, radial scalar folded in.
        w_inv = (jnp.reshape(w_r, ()).astype(f32) *
                 jax.lax.rsqrt(jnp.maximum(
                     jnp.sum(eps_f * eps_f, axis=1, keepdims=True), 1e-30)))

        b_eps = jnp.pad(jnp.asarray(bias_eps, f32).reshape(1, out_features),
                        ((0, 0), (0, out_pad - out_features)))
        b_inv = (jnp.reshape(bias_r, ()).astype(f32) *
                 jax.lax.rsqrt(jnp.maximum(jnp.sum(b_eps * b_eps), 1e-30)))
        b_pack = jnp.concatenate([params["b_mu"], params["b_rho"], b_eps * b_inv],
                                 axis=0)                            # (3, Out_pad) f32

        cost = pl.CostEstimate(
            flops=int(2 * B * in_features * out_features
                      + 12 * in_features * out_features),
            transcendentals=int(3 * in_features * out_features),
            bytes_accessed=int(3 * in_pad * out_pad * w_bytes
                               + 4 * (B * in_pad + B * out_pad) + 4 * 4 * out_pad))

        y_pad, kl_part = pl.pallas_call(
            _radial_kernel,
            grid_spec=pltpu.PrefetchScalarGridSpec(
                num_scalar_prefetch=0,
                grid=(n_n, n_k),
                in_specs=[
                    pl.BlockSpec((B, tk), lambda n, k: (0, k)),          # x
                    pl.BlockSpec((2, tk, tn), lambda n, k: (0, k, n)),   # [mu, rho]
                    pl.BlockSpec((tk, tn), lambda n, k: (k, n)),         # eps
                    pl.BlockSpec((tk, 1), lambda n, k: (k, 0)),          # inv eps norm
                    pl.BlockSpec((3, tn), lambda n, k: (0, n)),          # bias pack
                ],
                out_specs=(
                    pl.BlockSpec((B, tn), lambda n, k: (0, n)),          # y
                    pl.BlockSpec((1, 8, 128), lambda n, k: (n, 0, 0)),   # kl partials
                ),
                scratch_shapes=[
                    pltpu.VMEM((B, tn), f32),    # matmul accumulator
                    pltpu.VMEM((1, tn), f32),    # KL row accumulator
                ],
            ),
            out_shape=(
                jax.ShapeDtypeStruct((B, out_pad), f32),
                jax.ShapeDtypeStruct((n_n, 8, 128), f32),
            ),
            compiler_params=pltpu.CompilerParams(
                dimension_semantics=("parallel", "arbitrary"),
                vmem_limit_bytes=48 * 1024 * 1024,
            ),
            cost_estimate=cost,
        )(x_p, params["w_params"], eps_p, w_inv, b_pack)

        kl = jnp.sum(kl_part[:, 0, 0]) + kl_offset
        return y_pad[:, :out_features], kl

    return params, forward


if __name__ == "__main__":
    in_features, out_features, batch = 192, 320, 8

    key = jax.random.PRNGKey(0)
    ks = jax.random.split(key, 9)

    # Deterministic parameter init matching the module's __init__ ranges.
    w_mu = jax.random.uniform(ks[0], (out_features, in_features),
                              minval=-0.2, maxval=0.2, dtype=jnp.float32)
    w_rho = jax.random.uniform(ks[1], (out_features, in_features),
                               minval=-5.0, maxval=-4.0, dtype=jnp.float32)
    bias_mu = jax.random.uniform(ks[2], (out_features,),
                                 minval=-0.2, maxval=0.2, dtype=jnp.float32)
    bias_rho = jax.random.uniform(ks[3], (out_features,),
                                  minval=-5.0, maxval=-4.0, dtype=jnp.float32)

    # One-time init: persist params in the MXU-native bf16 layout.  Small tiles
    # here purely to exercise the multi-tile grid; production default is (512, 512).
    params, forward = make_radial_layer(w_mu, w_rho, bias_mu, bias_rho,
                                        tile_k=128, tile_n=128)

    # Per-forward stochastic inputs (the torch module samples these in forward()).
    w_eps = 0.5 * jax.random.normal(ks[4], (in_features, out_features),
                                    dtype=jnp.float32)
    bias_eps = 0.5 * jax.random.normal(ks[5], (out_features,), dtype=jnp.float32)
    w_r = jax.random.normal(ks[6], (1,), dtype=jnp.float32)
    bias_r = jax.random.normal(ks[7], (1,), dtype=jnp.float32)
    x = jax.random.normal(ks[8], (batch, in_features), dtype=jnp.float32)

    y, kl = forward(params, x, w_eps, bias_eps, w_r, bias_r)
    jax.block_until_ready((y, kl))

    # ---- pure-JAX reference (uses exactly the values the kernel sees) --------
    f32, bf16 = jnp.float32, jnp.bfloat16
    w_mu_k = w_mu.T.astype(bf16).astype(f32)        # (In, Out), as stored
    w_rho_k = w_rho.T.astype(bf16).astype(f32)
    eps_k = w_eps.astype(bf16).astype(f32)
    w_std_ref = _softplus(w_rho_k)
    w_inv_ref = (w_r.reshape(()) * jax.lax.rsqrt(
        jnp.maximum(jnp.sum(eps_k * eps_k, axis=1, keepdims=True), 1e-30)))
    w_ref = w_mu_k + w_std_ref * (eps_k * w_inv_ref)

    b_std_ref = _softplus(bias_rho)
    b_inv_ref = (bias_r.reshape(()) * jax.lax.rsqrt(
        jnp.maximum(jnp.sum(bias_eps * bias_eps), 1e-30)))
    bias_ref = bias_mu + b_std_ref * (bias_eps * b_inv_ref)

    y_ref = jnp.dot(x.astype(bf16), w_ref.astype(bf16),
                    preferred_element_type=f32) + bias_ref

    c = 0.5 * math.log(2.0 * math.pi)
    log_post_ref = -jnp.sum(jnp.log(w_std_ref)) - jnp.sum(jnp.log(b_std_ref))
    log_prior_ref = (-0.5 * jnp.sum(w_ref * w_ref) - w_ref.size * c
                     - 0.5 * jnp.sum(bias_ref * bias_ref) - bias_ref.size * c)
    kl_ref = log_post_ref - log_prior_ref

    assert y.shape == (batch, out_features) and y.dtype == jnp.float32
    assert jnp.allclose(y, y_ref, atol=5e-4, rtol=1e-3), "y mismatch vs reference"
    assert jnp.allclose(kl, kl_ref, rtol=1e-4, atol=1.0), "kl mismatch vs reference"

    print("KERNEL_OK")
</pallas_src>

<mosaic_0001>
module attributes {stable_mosaic.version = 11 : i64} {
  func.func @_radial_kernel(%arg0: i32, %arg1: i32, %arg2: memref<8x128xf32, #tpu.memory_space<vmem>>, %arg3: memref<2x128x128xbf16, #tpu.memory_space<vmem>>, %arg4: memref<128x128xbf16, #tpu.memory_space<vmem>>, %arg5: memref<128x1xf32, #tpu.memory_space<vmem>>, %arg6: memref<3x128xf32, #tpu.memory_space<vmem>>, %arg7: memref<8x128xf32, #tpu.memory_space<vmem>>, %arg8: memref<1x8x128xf32, #tpu.memory_space<vmem>>, %arg9: memref<8x128xf32, #tpu.memory_space<vmem>>, %arg10: memref<1x128xf32, #tpu.memory_space<vmem>>) attributes {dimension_semantics = [#tpu.dimension_semantics<parallel>, #tpu.dimension_semantics<arbitrary>], iteration_bounds = array<i64: 3, 2>, scalar_prefetch = 0 : i64, scratch_operands = 2 : i64, tpu.core_type = #tpu.core_type<tc>, window_params = [{transform_indices = @transform_0, window_bounds = array<i64: 8, 128>}, {transform_indices = @transform_1, window_bounds = array<i64: 2, 128, 128>}, {transform_indices = @transform_2, window_bounds = array<i64: 128, 128>}, {transform_indices = @transform_3, window_bounds = array<i64: 128, 1>}, {transform_indices = @transform_4, window_bounds = array<i64: 3, 128>}, {transform_indices = @transform_5, window_bounds = array<i64: 8, 128>}, {transform_indices = @transform_6, window_bounds = array<i64: 1, 8, 128>}]} {
    %c0_i32 = arith.constant 0 : i32
    %0 = arith.cmpi eq, %arg1, %c0_i32 : i32
    %1 = arith.extui %0 : i1 to i32
    %c0_i32_0 = arith.constant 0 : i32
    %2 = arith.cmpi ne, %1, %c0_i32_0 : i32
    scf.if %2 {
      %cst_25 = arith.constant 0.000000e+00 : f32
      %46 = vector.broadcast %cst_25 : f32 to vector<8x128xf32>
      %c0_26 = arith.constant 0 : index
      %c0_27 = arith.constant 0 : index
      %47 = vector.load %arg9[%c0_26, %c0_27] : memref<8x128xf32, #tpu.memory_space<vmem>>, vector<8x128xf32>
      tpu.vector_store %arg9[%c0_26, %c0_27], %46 {strides = array<i32>} : memref<8x128xf32, #tpu.memory_space<vmem>>, vector<8x128xf32>,
      %cst_28 = arith.constant 0.000000e+00 : f32
      %48 = vector.broadcast %cst_28 : f32 to vector<1x128xf32>
      %c0_29 = arith.constant 0 : index
      %c0_30 = arith.constant 0 : index
      %49 = vector.load %arg10[%c0_29, %c0_30] : memref<1x128xf32, #tpu.memory_space<vmem>>, vector<1x128xf32>
      tpu.vector_store %arg10[%c0_29, %c0_30], %48 {strides = array<i32>} : memref<1x128xf32, #tpu.memory_space<vmem>>, vector<1x128xf32>,
    } else {
    }
    %c0 = arith.constant 0 : index
    %c0_1 = arith.constant 0 : index
    %c0_2 = arith.constant 0 : index
    %3 = vector.load %arg3[%c0, %c0_1, %c0_2] : memref<2x128x128xbf16, #tpu.memory_space<vmem>>, vector<1x128x128xbf16>
    %4 = vector.shape_cast %3 : vector<1x128x128xbf16> to vector<128x128xbf16>
    %5 = arith.extf %4 : vector<128x128xbf16> to vector<128x128xf32>
    %c1 = arith.constant 1 : index
    %c0_3 = arith.constant 0 : index
    %c0_4 = arith.constant 0 : index
    %6 = vector.load %arg3[%c1, %c0_3, %c0_4] : memref<2x128x128xbf16, #tpu.memory_space<vmem>>, vector<1x128x128xbf16>
    %7 = vector.shape_cast %6 : vector<1x128x128xbf16> to vector<128x128xbf16>
    %8 = arith.extf %7 : vector<128x128xbf16> to vector<128x128xf32>
    %c0_5 = arith.constant 0 : index
    %c0_6 = arith.constant 0 : index
    %9 = vector.load %arg4[%c0_5, %c0_6] : memref<128x128xbf16, #tpu.memory_space<vmem>>, vector<128x128xbf16>
    %10 = arith.extf %9 : vector<128x128xbf16> to vector<128x128xf32>
    %cst = arith.constant 0.000000e+00 : f32
    %11 = vector.broadcast %cst : f32 to vector<128x128xf32>
    %12 = arith.maximumf %8, %11 : vector<128x128xf32>
    %13 = math.absf %8 : vector<128x128xf32>
    %cst_7 = arith.constant 0.000000e+00 : f32
    %14 = vector.broadcast %cst_7 : f32 to vector<128x128xf32>
    %15 = arith.subf %14, %13 : vector<128x128xf32>
    %16 = math.exp %15 : vector<128x128xf32>
    %cst_8 = arith.constant 1.000000e+00 : f32
    %17 = vector.broadcast %cst_8 : f32 to vector<128x128xf32>
    %18 = arith.addf %17, %16 : vector<128x128xf32>
    %19 = math.log %18 : vector<128x128xf32>
    %20 = arith.addf %12, %19 : vector<128x128xf32>
    %c0_9 = arith.constant 0 : index
    %c0_10 = arith.constant 0 : index
    %21 = vector.load %arg5[%c0_9, %c0_10] : memref<128x1xf32, #tpu.memory_space<vmem>>, vector<128x1xf32>
    %22 = vector.broadcast %21 : vector<128x1xf32> to vector<128x128xf32>
    %23 = arith.mulf %10, %22 : vector<128x128xf32>
    %24 = arith.mulf %20, %23 : vector<128x128xf32>
    %25 = arith.addf %5, %24 : vector<128x128xf32>
    %c0_11 = arith.constant 0 : index
    %c0_12 = arith.constant 0 : index
    %26 = vector.load %arg9[%c0_11, %c0_12] : memref<8x128xf32, #tpu.memory_space<vmem>>, vector<8x128xf32>
    %c0_13 = arith.constant 0 : index
    %c0_14 = arith.constant 0 : index
    %27 = vector.load %arg2[%c0_13, %c0_14] : memref<8x128xf32, #tpu.memory_space<vmem>>, vector<8x128xf32>
    %28 = arith.truncf %27 : vector<8x128xf32> to vector<8x128xbf16>
    %29 = arith.truncf %25 : vector<128x128xf32> to vector<128x128xbf16>
    %cst_15 = arith.constant dense<0.000000e+00> : vector<8x128xf32>
    %30 = tpu.matmul %28, %29, %cst_15 {dimension_numbers = #tpu.dot_dimension_numbers<[1], [0], [0], [1], [0, 0, 1, 1], [], []>} : vector<8x128xbf16>, vector<128x128xbf16>, vector<8x128xf32> -> vector<8x128xf32>
    %31 = arith.addf %26, %30 : vector<8x128xf32>
    %c0_16 = arith.constant 0 : index
    %c0_17 = arith.constant 0 : index
    %32 = vector.load %arg9[%c0_16, %c0_17] : memref<8x128xf32, #tpu.memory_space<vmem>>, vector<8x128xf32>
    tpu.vector_store %arg9[%c0_16, %c0_17], %31 {strides = array<i32>} : memref<8x128xf32, #tpu.memory_space<vmem>>, vector<8x128xf32>,
    %c0_18 = arith.constant 0 : index
    %c0_19 = arith.constant 0 : index
    %33 = vector.load %arg10[%c0_18, %c0_19] : memref<1x128xf32, #tpu.memory_space<vmem>>, vector<1x128xf32>
    %cst_20 = arith.constant 5.000000e-01 : f32
    %34 = vector.broadcast %cst_20 : f32 to vector<128x128xf32>
    %35 = arith.mulf %34, %25 : vector<128x128xf32>
    %36 = arith.mulf %35, %25 : vector<128x128xf32>
    %37 = math.log %20 : vector<128x128xf32>
    %38 = arith.subf %36, %37 : vector<128x128xf32>
    %cst_21 = arith.constant dense<0.000000e+00> : vector<128xf32>
    %39 = vector.multi_reduction <add>, %38, %cst_21 [0] : vector<128x128xf32> to vector<128xf32>
    %40 = vector.shape_cast %39 : vector<128xf32> to vector<1x128xf32>
    %41 = arith.addf %33, %40 : vector<1x128xf32>
    %c0_22 = arith.constant 0 : index
    %c0_23 = arith.constant 0 : index
    %42 = vector.load %arg10[%c0_22, %c0_23] : memref<1x128xf32, #tpu.memory_space<vmem>>, vector<1x128xf32>
    tpu.vector_store %arg10[%c0_22, %c0_23], %41 {strides = array<i32>} : memref<1x128xf32, #tpu.memory_space<vmem>>, vector<1x128xf32>,
    %c1_i32 = arith.constant 1 : i32
    %43 = arith.cmpi eq, %arg1, %c1_i32 : i32
    %44 = arith.extui %43 : i1 to i32
    %c0_i32_24 = arith.constant 0 : i32
    %45 = arith.cmpi ne, %44, %c0_i32_24 : i32
    scf.if %45 {
      %c0_25 = arith.constant 0 : index
      %c0_26 = arith.constant 0 : index
      %46 = vector.load %arg6[%c0_25, %c0_26] : memref<3x128xf32, #tpu.memory_space<vmem>>, vector<1x128xf32>
      %c1_27 = arith.constant 1 : index
      %c0_28 = arith.constant 0 : index
      %47 = vector.load %arg6[%c1_27, %c0_28] : memref<3x128xf32, #tpu.memory_space<vmem>>, vector<1x128xf32>
      %c2 = arith.constant 2 : index
      %c0_29 = arith.constant 0 : index
      %48 = vector.load %arg6[%c2, %c0_29] : memref<3x128xf32, #tpu.memory_space<vmem>>, vector<1x128xf32>
      %cst_30 = arith.constant 0.000000e+00 : f32
      %49 = vector.broadcast %cst_30 : f32 to vector<1x128xf32>
      %50 = arith.maximumf %47, %49 : vector<1x128xf32>
      %51 = math.absf %47 : vector<1x128xf32>
      %cst_31 = arith.constant 0.000000e+00 : f32
      %52 = vector.broadcast %cst_31 : f32 to vector<1x128xf32>
      %53 = arith.subf %52, %51 : vector<1x128xf32>
      %54 = math.exp %53 : vector<1x128xf32>
      %cst_32 = arith.constant 1.000000e+00 : f32
      %55 = vector.broadcast %cst_32 : f32 to vector<1x128xf32>
      %56 = arith.addf %55, %54 : vector<1x128xf32>
      %57 = math.log %56 : vector<1x128xf32>
      %58 = arith.addf %50, %57 : vector<1x128xf32>
      %59 = arith.mulf %58, %48 : vector<1x128xf32>
      %60 = arith.addf %46, %59 : vector<1x128xf32>
      %c0_33 = arith.constant 0 : index
      %c0_34 = arith.constant 0 : index
      %61 = vector.load %arg9[%c0_33, %c0_34] : memref<8x128xf32, #tpu.memory_space<vmem>>, vector<8x128xf32>
      %62 = vector.broadcast %60 : vector<1x128xf32> to vector<8x128xf32>
      %63 = arith.addf %61, %62 : vector<8x128xf32>
      %c0_35 = arith.constant 0 : index
      %c0_36 = arith.constant 0 : index
      %64 = vector.load %arg7[%c0_35, %c0_36] : memref<8x128xf32, #tpu.memory_space<vmem>>, vector<8x128xf32>
      tpu.vector_store %arg7[%c0_35, %c0_36], %63 {strides = array<i32>} : memref<8x128xf32, #tpu.memory_space<vmem>>, vector<8x128xf32>,
      %c0_37 = arith.constant 0 : index
      %c0_38 = arith.constant 0 : index
      %65 = vector.load %arg10[%c0_37, %c0_38] : memref<1x128xf32, #tpu.memory_space<vmem>>, vector<1x128xf32>
      %cst_39 = arith.constant 5.000000e-01 : f32
      %66 = vector.broadcast %cst_39 : f32 to vector<1x128xf32>
      %67 = arith.mulf %66, %60 : vector<1x128xf32>
      %68 = arith.mulf %67, %60 : vector<1x128xf32>
      %69 = arith.addf %65, %68 : vector<1x128xf32>
      %70 = math.log %58 : vector<1x128xf32>
      %71 = arith.subf %69, %70 : vector<1x128xf32>
      %72 = vector.shape_cast %71 : vector<1x128xf32> to vector<1x1x128xf32>
      %cst_40 = arith.constant dense<0.000000e+00> : vector<1xf32>
      %73 = vector.multi_reduction <add>, %72, %cst_40 [1, 2] : vector<1x1x128xf32> to vector<1xf32>
      %74 = vector.shape_cast %73 : vector<1xf32> to vector<1x1x1xf32>
      %75 = vector.extract %74[0, 0, 0] : f32 from vector<1x1x1xf32>
      %76 = vector.broadcast %75 : f32 to vector<1x1xf32>
      %77 = vector.shape_cast %76 : vector<1x1xf32> to vector<1x1x1xf32>
      %78 = vector.broadcast %77 : vector<1x1x1xf32> to vector<1x8x128xf32>
      %c0_41 = arith.constant 0 : index
      %c0_42 = arith.constant 0 : index
      %c0_43 = arith.constant 0 : index
      %79 = vector.load %arg8[%c0_41, %c0_42, %c0_43] : memref<1x8x128xf32, #tpu.memory_space<vmem>>, vector<1x8x128xf32>
      tpu.vector_store %arg8[%c0_41, %c0_42, %c0_43], %78 {strides = array<i32>} : memref<1x8x128xf32, #tpu.memory_space<vmem>>, vector<1x8x128xf32>,
    } else {
    }
    return
  }
  func.func @transform_0(%arg0: i32, %arg1: i32) -> (i32, i32) {
    %c0_i32 = arith.constant 0 : i32
    %c0_i32_0 = arith.constant 0 : i32
    return %c0_i32, %arg1 : i32, i32
  }
  func.func @transform_1(%arg0: i32, %arg1: i32) -> (i32, i32, i32) {
    %c0_i32 = arith.constant 0 : i32
    %c0_i32_0 = arith.constant 0 : i32
    return %c0_i32, %arg1, %arg0 : i32, i32, i32
  }
  func.func @transform_2(%arg0: i32, %arg1: i32) -> (i32, i32) {
    %c0_i32 = arith.constant 0 : i32
    return %arg1, %arg0 : i32, i32
  }
  func.func @transform_3(%arg0: i32, %arg1: i32) -> (i32, i32) {
    %c0_i32 = arith.constant 0 : i32
    %c0_i32_0 = arith.constant 0 : i32
    return %arg1, %c0_i32 : i32, i32
  }
  func.func @transform_4(%arg0: i32, %arg1: i32) -> (i32, i32) {
    %c0_i32 = arith.constant 0 : i32
    %c0_i32_0 = arith.constant 0 : i32
    return %c0_i32, %arg0 : i32, i32
  }
  func.func @transform_5(%arg0: i32, %arg1: i32) -> (i32, i32) {
    %c0_i32 = arith.constant 0 : i32
    %c0_i32_0 = arith.constant 0 : i32
    return %c0_i32, %arg0 : i32, i32
  }
  func.func @transform_6(%arg0: i32, %arg1: i32) -> (i32, i32, i32) {
    %c0_i32 = arith.constant 0 : i32
    %c0_i32_0 = arith.constant 0 : i32
    %c0_i32_1 = arith.constant 0 : i32
    return %arg0, %c0_i32, %c0_i32_0 : i32, i32, i32
  }
}

</mosaic_0001>

<llo_original>
// kernel: forward.1
$region0: #{forward.1}
  #allocation0 [shape = 'u32[]', space=smem, size = 0x4, offset = 0x4, fixed_abs, tag = 'smem constant byte address 0x4 - core index']
  #allocation1 [shape = 'u32[144,128]{1,0:T(1,128)}', space=vmem, size = 0x12000, scoped, tag = 'internal scratch']
  #allocation2 [shape = 'f32[8,128]{1,0:T(8,128)}', space=vmem, size = 0x1000, scoped, tag = 'scratch operand']
  #allocation3 [shape = 'f32[1,128]{1,0:T(1,128)}', space=vmem, size = 0x200, scoped, tag = 'scratch operand']
  %s0 = inlined_call_operand.vmem [shape: f32[8,256], index: 0, kind: input, shape index: {}]
  %s1 = inlined_call_operand.vmem [shape: bf16[2,256,384], index: 1, kind: input, shape index: {}]
  %s2 = inlined_call_operand.vmem [shape: bf16[256,384], index: 2, kind: input, shape index: {}]
  %s3 = inlined_call_operand.vmem [shape: f32[256,1], index: 3, kind: input, shape index: {}]
  %s4 = inlined_call_operand.vmem [shape: f32[3,384], index: 4, kind: input, shape index: {}]
  %s5 = inlined_call_operand.hbm [shape: f32[8,384], index: 5, kind: output, shape index: {0}]
  %s6 = inlined_call_operand.vmem [shape: f32[3,8,128], index: 6, kind: output, shape index: {1}]
  %7 = xla_tuple %s5, %s6
  %s8 = sld [smem:[#allocation0]]
  $region151: #{forward.1} parent=0
    _
  %s10 = ssub.s32 1, %s8
  %s11 = scalar_select 0, %s10, %s8
  $region1: #{forward.1} parent=0
    #allocation4 [shape = 'u8[131072]{0}', space=vmem, size = 0x20000, scoped, tag = 'input window, operand 1']
    #allocation5 [shape = 'u8[65536]{0}', space=vmem, size = 0x10000, scoped, tag = 'input window, operand 2']
    #allocation6 [shape = 'u8[8192]{0}', space=vmem, size = 0x2000, scoped, tag = 'output window, operand 0']
    #allocation7 [shape = 's32[2]{0}', space=sflag, size = 0x8, scoped, tag = 'scoped memory for forward.1']
    %12 = vsyncpa [#allocation7], 0
    %s13 = scalar_lea.sflag [#allocation7], 1
    %14 = vsyncpa %s13, 0
    loop: start=0, step=1, limit=8
    $region2: #{forward.1} parent=1 // loop_pre_header
      _
    $region3: #{forward.1} parent=1 // loop_header
      %s16 = sphi 0, %s20
      %p17 = scmp.ge.s32.totalorder %s16, 8
      %s23 = sphi 0, %s35
      %s24 = sphi 0, %s31
      %s25 = sphi 0, %s23
      %s26 = sphi 0, %s24
      %s27 = sphi 0, %s25
      %s28 = sphi 0, %s26
      %s38 = sphi 0, %s40
      %s41 = sphi 0, %s38
      %s42 = sphi 0, %s41
      %s58 = sphi 0, %s42
      %s66 = sphi 0, %s68
      %s69 = sphi 0, %s66
      %s70 = sphi 0, %s69
      %s86 = sphi 0, %s70
      %s94 = sphi 0, %s96
      %s97 = sphi 0, %s94
      %s98 = sphi 0, %s97
      %s114 = sphi 0, %s98
      %s120 = sphi 0, %s122
      %s123 = sphi 0, %s120
      %s124 = sphi 0, %s123
      %s140 = sphi 0, %s124
      %s146 = sphi 0, %s148
      %s149 = sphi 0, %s146
      %s150 = sphi 0, %s149
      %s166 = sphi 0, %s150
      %s172 = sphi 0, %s174
      %s175 = sphi 0, %s172
      %s176 = sphi 0, %s175
      %s192 = sphi 0, %s176
      %s198 = sphi 0, %s200
      %s201 = sphi 0, %s198
      %s202 = sphi 0, %s201
      %s218 = sphi 0, %s202
    $region4: #{forward.1} parent=1 // loop_header_branch
      %19 = sbr.rel (%p17) target = $region8
    $region5: #{forward.1} parent=1 // loop_body
      %s21 = ssub.s32 %s16, 1
      %s22 = ssub.s32 %s16, 2
      %s29 = sadd.s32 1, %s24
      %p30 = scmp.ge.s32.totalorder %s29, 2
      %s31 = scalar_select %p30, 0, %s29
      %s32 = sadd.s32 1, %s23
      %s33 = scalar_select %p30, %s32, %s23
      %p34 = scmp.ge.s32.totalorder %s33, 3
      %s35 = scalar_select %p34, 0, %s33
      %s36 = ssub.s32 %s24, %s31
      %p37 = scmp.eq.s32.totalorder %s36, 0
      %s39 = sadd.s32 %s38, 1
      %s40 = scalar_select %p37, %s38, %s39
      %p43 = pneg %p37
      %p44 = scmp.eq.s32.totalorder %s16, 5
      %p45 = por %p43, %p44
      %p46 = scmp.ne.s32.totalorder %s38, %s41
      %p47 = scmp.eq.s32.totalorder %s16, 0
      %p48 = por %p46, %p47
      %p49 = scmp.ne.s32.totalorder %s38, %s41
      %p50 = scmp.eq.s32.totalorder %s21, 5
      %p51 = por %p49, %p50
      %p52 = scmp.ne.s32.totalorder %s41, %s42
      %p53 = scmp.eq.s32.totalorder %s21, 0
      %p54 = por %p52, %p53
      %p55 = scmp.ne.s32.totalorder %s41, %s42
      %p56 = scmp.eq.s32.totalorder %s22, 5
      %p57 = por %p55, %p56
      %p59 = scmp.ne.s32.totalorder %s42, %s58
      %p60 = scmp.eq.s32.totalorder %s22, 0
      %p61 = por %p59, %p60
      %s62 = ssub.s32 %s24, %s31
      %s63 = ssub.s32 %s23, %s35
      %s64 = sor.u32 %s62, %s63
      %p65 = scmp.eq.s32.totalorder %s64, 0
      %s67 = sadd.s32 %s66, 1
      %s68 = scalar_select %p65, %s66, %s67
      %p71 = pneg %p65
      %p72 = scmp.eq.s32.totalorder %s16, 5
      %p73 = por %p71, %p72
      %p74 = scmp.ne.s32.totalorder %s66, %s69
      %p75 = scmp.eq.s32.totalorder %s16, 0
      %p76 = por %p74, %p75
      %p77 = scmp.ne.s32.totalorder %s66, %s69
      %p78 = scmp.eq.s32.totalorder %s21, 5
      %p79 = por %p77, %p78
      %p80 = scmp.ne.s32.totalorder %s69, %s70
      %p81 = scmp.eq.s32.totalorder %s21, 0
      %p82 = por %p80, %p81
      %p83 = scmp.ne.s32.totalorder %s69, %s70
      %p84 = scmp.eq.s32.totalorder %s22, 5
      %p85 = por %p83, %p84
      %p87 = scmp.ne.s32.totalorder %s70, %s86
      %p88 = scmp.eq.s32.totalorder %s22, 0
      %p89 = por %p87, %p88
      %s90 = ssub.s32 %s24, %s31
      %s91 = ssub.s32 %s23, %s35
      %s92 = sor.u32 %s90, %s91
      %p93 = scmp.eq.s32.totalorder %s92, 0
      %s95 = sadd.s32 %s94, 1
      %s96 = scalar_select %p93, %s94, %s95
      %p99 = pneg %p93
      %p100 = scmp.eq.s32.totalorder %s16, 5
      %p101 = por %p99, %p100
      %p102 = scmp.ne.s32.totalorder %s94, %s97
      %p103 = scmp.eq.s32.totalorder %s16, 0
      %p104 = por %p102, %p103
      %p105 = scmp.ne.s32.totalorder %s94, %s97
      %p106 = scmp.eq.s32.totalorder %s21, 5
      %p107 = por %p105, %p106
      %p108 = scmp.ne.s32.totalorder %s97, %s98
      %p109 = scmp.eq.s32.totalorder %s21, 0
      %p110 = por %p108, %p109
      %p111 = scmp.ne.s32.totalorder %s97, %s98
      %p112 = scmp.eq.s32.totalorder %s22, 5
      %p113 = por %p111, %p112
      %p115 = scmp.ne.s32.totalorder %s98, %s114
      %p116 = scmp.eq.s32.totalorder %s22, 0
      %p117 = por %p115, %p116
      %s118 = ssub.s32 %s24, %s31
      %p119 = scmp.eq.s32.totalorder %s118, 0
      %s121 = sadd.s32 %s120, 1
      %s122 = scalar_select %p119, %s120, %s121
      %p125 = pneg %p119
      %p126 = scmp.eq.s32.totalorder %s16, 5
      %p127 = por %p125, %p126
      %p128 = scmp.ne.s32.totalorder %s120, %s123
      %p129 = scmp.eq.s32.totalorder %s16, 0
      %p130 = por %p128, %p129
      %p131 = scmp.ne.s32.totalorder %s120, %s123
      %p132 = scmp.eq.s32.totalorder %s21, 5
      %p133 = por %p131, %p132
      %p134 = scmp.ne.s32.totalorder %s123, %s124
      %p135 = scmp.eq.s32.totalorder %s21, 0
      %p136 = por %p134, %p135
      %p137 = scmp.ne.s32.totalorder %s123, %s124
      %p138 = scmp.eq.s32.totalorder %s22, 5
      %p139 = por %p137, %p138
      %p141 = scmp.ne.s32.totalorder %s124, %s140
      %p142 = scmp.eq.s32.totalorder %s22, 0
      %p143 = por %p141, %p142
      %s144 = ssub.s32 %s23, %s35
      %p145 = scmp.eq.s32.totalorder %s144, 0
      %s147 = sadd.s32 %s146, 1
      %s148 = scalar_select %p145, %s146, %s147
      %p151 = pneg %p145
      %p152 = scmp.eq.s32.totalorder %s16, 5
      %p153 = por %p151, %p152
      %p154 = scmp.ne.s32.totalorder %s146, %s149
      %p155 = scmp.eq.s32.totalorder %s16, 0
      %p156 = por %p154, %p155
      %p157 = scmp.ne.s32.totalorder %s146, %s149
      %p158 = scmp.eq.s32.totalorder %s21, 5
      %p159 = por %p157, %p158
      %p160 = scmp.ne.s32.totalorder %s149, %s150
      %p161 = scmp.eq.s32.totalorder %s21, 0
      %p162 = por %p160, %p161
      %p163 = scmp.ne.s32.totalorder %s149, %s150
      %p164 = scmp.eq.s32.totalorder %s22, 5
      %p165 = por %p163, %p164
      %p167 = scmp.ne.s32.totalorder %s150, %s166
      %p168 = scmp.eq.s32.totalorder %s22, 0
      %p169 = por %p167, %p168
      %s170 = ssub.s32 %s23, %s35
      %p171 = scmp.eq.s32.totalorder %s170, 0
      %s173 = sadd.s32 %s172, 1
      %s174 = scalar_select %p171, %s172, %s173
      %p177 = pneg %p171
      %p178 = scmp.eq.s32.totalorder %s16, 5
      %p179 = por %p177, %p178
      %p180 = scmp.ne.s32.totalorder %s172, %s175
      %p181 = scmp.eq.s32.totalorder %s16, 0
      %p182 = por %p180, %p181
      %p183 = scmp.ne.s32.totalorder %s172, %s175
      %p184 = scmp.eq.s32.totalorder %s21, 5
      %p185 = por %p183, %p184
      %p186 = scmp.ne.s32.totalorder %s175, %s176
      %p187 = scmp.eq.s32.totalorder %s21, 0
      %p188 = por %p186, %p187
      %p189 = scmp.ne.s32.totalorder %s175, %s176
      %p190 = scmp.eq.s32.totalorder %s22, 5
      %p191 = por %p189, %p190
      %p193 = scmp.ne.s32.totalorder %s176, %s192
      %p194 = scmp.eq.s32.totalorder %s22, 0
      %p195 = por %p193, %p194
      %s196 = ssub.s32 %s23, %s35
      %p197 = scmp.eq.s32.totalorder %s196, 0
      %s199 = sadd.s32 %s198, 1
      %s200 = scalar_select %p197, %s198, %s199
      %p203 = pneg %p197
      %p204 = scmp.eq.s32.totalorder %s16, 5
      %p205 = por %p203, %p204
      %p206 = scmp.ne.s32.totalorder %s198, %s201
      %p207 = scmp.eq.s32.totalorder %s16, 0
      %p208 = por %p206, %p207
      %p209 = scmp.ne.s32.totalorder %s198, %s201
      %p210 = scmp.eq.s32.totalorder %s21, 5
      %p211 = por %p209, %p210
      %p212 = scmp.ne.s32.totalorder %s201, %s202
      %p213 = scmp.eq.s32.totalorder %s21, 0
      %p214 = por %p212, %p213
      %p215 = scmp.ne.s32.totalorder %s201, %s202
      %p216 = scmp.eq.s32.totalorder %s22, 5
      %p217 = por %p215, %p216
      %p219 = scmp.ne.s32.totalorder %s202, %s218
      %p220 = scmp.eq.s32.totalorder %s22, 0
      %p221 = por %p219, %p220
      %p222 = scmp.le.s32.totalorder 1, %s16
      %p223 = scmp.lt.s32.totalorder %s16, 7
      %p224 = pnand %p222, %p223
      %p225 = pneg %p224
      // Predicated region
      $region9: #{forward.1} parent=5 // pred_check
        _
      $region10: #{forward.1} parent=5 // pred_check_branch
        %227 = sbr.rel (%p224) target = $region12
      $region11: #{forward.1} parent=5 // pred_region
        %s228 = ssub.s32 %s16, 1
      $region12: #{forward.1} parent=5 // pred_fallthru
        _
      %p229 = scmp.lt.s32.totalorder %s16, 6
      // Predicated region
      $region13: #{forward.1} parent=5 // pred_check
        %p230 = pneg %p229
      $region14: #{forward.1} parent=5 // pred_check_branch
        %232 = sbr.rel (%p230) target = $region16
      $region15: #{forward.1} parent=5 // pred_region
        // Predicated region
        $region17: #{forward.1} parent=15 // pred_check
          %p233 = pneg %p48
        $region18: #{forward.1} parent=15 // pred_check_branch
          %235 = sbr.rel (%p233) target = $region20
        $region19: #{forward.1} parent=15 // pred_region
          %p236 = scmp.lt.s32.totalorder %s24, 1
          %s237 = scalar_select %p236, %s24, 1
          %s238 = smul.addr %s237, 8
          %s239 = scalar_lea.vmem %s0, %s238
        $region20: #{forward.1} parent=15 // pred_fallthru
          _
        // Predicated region
        $region21: #{forward.1} parent=15 // pred_check
          %p240 = pneg %p76
        $region22: #{forward.1} parent=15 // pred_check_branch
          %242 = sbr.rel (%p240) target = $region24
        $region23: #{forward.1} parent=15 // pred_region
          %s243 = sand.u32 %s66, 1
          %s244 = sand.u32 %s66, 1
          %s245 = smul.addr %s244, 128
          %s246 = scalar_lea.vmem [#allocation4], %s245
          %s247 = smul.u32 16, %s24
          %s248 = smul.addr %s247, 3
          %s249 = sadd.s32 %s23, %s248
          %s250 = smul.addr %s249, 4
          %s251 = scalar_lea.vmem %s1, %s250
          // Predicated region
          $region25: #{forward.1} parent=23 // pred_check
            _
          $region26: #{forward.1} parent=23 // pred_check_branch
            %253 = sbr.rel (0) target = $region28
          $region27: #{forward.1} parent=23 // pred_region
            // Predicated region
            $region29: #{forward.1} parent=27 // pred_check
              _
            $region30: #{forward.1} parent=27 // pred_check_branch
              %255 = sbr.rel target = $region32
            $region31: #{forward.1} parent=27 // pred_region
              // Predicated region
              $region44: #{forward.1} parent=31 // pred_check
                _
              $region45: #{forward.1} parent=31 // pred_check_branch
                %332 = sbr.rel (0) target = $region47
              $region46: #{forward.1} parent=31 // pred_region
                loop: start=0, step=1, limit=1
                $region48: #{forward.1} parent=46 // loop_pre_header
                  _
                $region49: #{forward.1} parent=46 // loop_header
                  %s334 = sphi 0, %s338
                  %p335 = scmp.ge.s32.totalorder %s334, 1
                  %s339 = sphi %s251, %s251
                  %s340 = sphi %s246, %s246
                $region50: #{forward.1} parent=46 // loop_header_branch
                  %337 = sbr.rel (%p335) target = $region54
                $region51: #{forward.1} parent=46 // loop_body
                  _
                $region52: #{forward.1} parent=46 // loop_footer
                  %s338 = sadd.s32 1, %s334
                $region53: #{forward.1} parent=46 // loop_footer_branch
                  %333 = sbr.rel target = $region49
                $region54: #{forward.1} parent=46 // loop_exit
                  _
                loop: start=0, step=1, limit=1
                $region55: #{forward.1} parent=46 // loop_pre_header
                  _
                $region56: #{forward.1} parent=46 // loop_header
                  %s343 = sphi 0, %s347
                  %p344 = scmp.ge.s32.totalorder %s343, 1
                  %s348 = sphi %s251, %s251
                  %s349 = sphi %s246, %s246
                $region57: #{forward.1} parent=46 // loop_header_branch
                  %346 = sbr.rel (%p344) target = $region61
                $region58: #{forward.1} parent=46 // loop_body
                  %v350 = vld [vmem:[%s348] sm:$0xf]
                  %351 = vst [vmem:[%s349] sm:$0xf] %v350
                  %v352 = vld [vmem:[%s348 + $0xc] sm:$0xf]
                  %353 = vst [vmem:[%s349 + $0x4] sm:$0xf] %v352
                  %v354 = vld [vmem:[%s348 + $0x18] sm:$0xf]
                  %355 = vst [vmem:[%s349 + $0x8] sm:$0xf] %v354
                  %v356 = vld [vmem:[%s348 + $0x24] sm:$0xf]
                  %357 = vst [vmem:[%s349 + $0xc] sm:$0xf] %v356
                  %v358 = vld [vmem:[%s348 + $0x30] sm:$0xf]
                  %359 = vst [vmem:[%s349 + $0x10] sm:$0xf] %v358
                  %v360 = vld [vmem:[%s348 + $0x3c] sm:$0xf]
                  %361 = vst [vmem:[%s349 + $0x14] sm:$0xf] %v360
                  %v362 = vld [vmem:[%s348 + $0x48] sm:$0xf]
                  %363 = vst [vmem:[%s349 + $0x18] sm:$0xf] %v362
                  %v364 = vld [vmem:[%s348 + $0x54] sm:$0xf]
                  %365 = vst [vmem:[%s349 + $0x1c] sm:$0xf] %v364
                  %v366 = vld [vmem:[%s348 + $0x60] sm:$0xf]
                  %367 = vst [vmem:[%s349 + $0x20] sm:$0xf] %v366
                  %v368 = vld [vmem:[%s348 + $0x6c] sm:$0xf]
                  %369 = vst [vmem:[%s349 + $0x24] sm:$0xf] %v368
                  %v370 = vld [vmem:[%s348 + $0x78] sm:$0xf]
                  %371 = vst [vmem:[%s349 + $0x28] sm:$0xf] %v370
                  %v372 = vld [vmem:[%s348 + $0x84] sm:$0xf]
                  %373 = vst [vmem:[%s349 + $0x2c] sm:$0xf] %v372
                  %v374 = vld [vmem:[%s348 + $0x90] sm:$0xf]
                  %375 = vst [vmem:[%s349 + $0x30] sm:$0xf] %v374
                  %v376 = vld [vmem:[%s348 + $0x9c] sm:$0xf]
                  %377 = vst [vmem:[%s349 + $0x34] sm:$0xf] %v376
                  %v378 = vld [vmem:[%s348 + $0xa8] sm:$0xf]
                  %379 = vst [vmem:[%s349 + $0x38] sm:$0xf] %v378
                  %v380 = vld [vmem:[%s348 + $0xb4] sm:$0xf]
                  %381 = vst [vmem:[%s349 + $0x3c] sm:$0xf] %v380
                  %v382 = vld [vmem:[%s348 + $0x180] sm:$0xf]
                  %383 = vst [vmem:[%s349 + $0x40] sm:$0xf] %v382
                  %v384 = vld [vmem:[%s348 + $0x18c] sm:$0xf]
                  %385 = vst [vmem:[%s349 + $0x44] sm:$0xf] %v384
                  %v386 = vld [vmem:[%s348 + $0x198] sm:$0xf]
                  %387 = vst [vmem:[%s349 + $0x48] sm:$0xf] %v386
                  %v388 = vld [vmem:[%s348 + $0x1a4] sm:$0xf]
                  %389 = vst [vmem:[%s349 + $0x4c] sm:$0xf] %v388
                  %v390 = vld [vmem:[%s348 + $0x1b0] sm:$0xf]
                  %391 = vst [vmem:[%s349 + $0x50] sm:$0xf] %v390
                  %v392 = vld [vmem:[%s348 + $0x1bc] sm:$0xf]
                  %393 = vst [vmem:[%s349 + $0x54] sm:$0xf] %v392
                  %v394 = vld [vmem:[%s348 + $0x1c8] sm:$0xf]
                  %395 = vst [vmem:[%s349 + $0x58] sm:$0xf] %v394
                  %v396 = vld [vmem:[%s348 + $0x1d4] sm:$0xf]
                  %397 = vst [vmem:[%s349 + $0x5c] sm:$0xf] %v396
                  %v398 = vld [vmem:[%s348 + $0x1e0] sm:$0xf]
                  %399 = vst [vmem:[%s349 + $0x60] sm:$0xf] %v398
                  %v400 = vld [vmem:[%s348 + $0x1ec] sm:$0xf]
                  %401 = vst [vmem:[%s349 + $0x64] sm:$0xf] %v400
                  %v402 = vld [vmem:[%s348 + $0x1f8] sm:$0xf]
                  %403 = vst [vmem:[%s349 + $0x68] sm:$0xf] %v402
                  %v404 = vld [vmem:[%s348 + $0x204] sm:$0xf]
                  %405 = vst [vmem:[%s349 + $0x6c] sm:$0xf] %v404
                  %v406 = vld [vmem:[%s348 + $0x210] sm:$0xf]
                  %407 = vst [vmem:[%s349 + $0x70] sm:$0xf] %v406
                  %v408 = vld [vmem:[%s348 + $0x21c] sm:$0xf]
                  %409 = vst [vmem:[%s349 + $0x74] sm:$0xf] %v408
                  %v410 = vld [vmem:[%s348 + $0x228] sm:$0xf]
                  %411 = vst [vmem:[%s349 + $0x78] sm:$0xf] %v410
                  %v412 = vld [vmem:[%s348 + $0x234] sm:$0xf]
                  %413 = vst [vmem:[%s349 + $0x7c] sm:$0xf] %v412
                $region59: #{forward.1} parent=46 // loop_footer
                  %s347 = sadd.s32 1, %s343
                $region60: #{forward.1} parent=46 // loop_footer_branch
                  %342 = sbr.rel target = $region56
                $region61: #{forward.1} parent=46 // loop_exit
                  _
              $region47: #{forward.1} parent=31 // pred_fallthru
                _
            $region32: #{forward.1} parent=27 // pred_fallthru
              _
            // Predicated region
            $region33: #{forward.1} parent=27 // pred_check
              _
            $region34: #{forward.1} parent=27 // pred_check_branch
              %257 = sbr.rel (0) target = $region36
            $region35: #{forward.1} parent=27 // pred_region
              loop: start=0, step=1, limit=1
              $region37: #{forward.1} parent=35 // loop_pre_header
                _
              $region38: #{forward.1} parent=35 // loop_header
                %s260 = sphi 0, %s264
                %p261 = scmp.ge.s32.totalorder %s260, 1
                %s265 = sphi %s251, %s251
                %s266 = sphi %s246, %s246
              $region39: #{forward.1} parent=35 // loop_header_branch
                %263 = sbr.rel (%p261) target = $region43
              $region40: #{forward.1} parent=35 // loop_body
                %v267 = vld [vmem:[%s265] sm:$0xf]
                %268 = vst [vmem:[%s266] sm:$0xf] %v267
                %v269 = vld [vmem:[%s265 + $0xc] sm:$0xf]
                %270 = vst [vmem:[%s266 + $0x4] sm:$0xf] %v269
                %v271 = vld [vmem:[%s265 + $0x18] sm:$0xf]
                %272 = vst [vmem:[%s266 + $0x8] sm:$0xf] %v271
                %v273 = vld [vmem:[%s265 + $0x24] sm:$0xf]
                %274 = vst [vmem:[%s266 + $0xc] sm:$0xf] %v273
                %v275 = vld [vmem:[%s265 + $0x30] sm:$0xf]
                %276 = vst [vmem:[%s266 + $0x10] sm:$0xf] %v275
                %v277 = vld [vmem:[%s265 + $0x3c] sm:$0xf]
                %278 = vst [vmem:[%s266 + $0x14] sm:$0xf] %v277
                %v279 = vld [vmem:[%s265 + $0x48] sm:$0xf]
                %280 = vst [vmem:[%s266 + $0x18] sm:$0xf] %v279
                %v281 = vld [vmem:[%s265 + $0x54] sm:$0xf]
                %282 = vst [vmem:[%s266 + $0x1c] sm:$0xf] %v281
                %v283 = vld [vmem:[%s265 + $0x60] sm:$0xf]
                %284 = vst [vmem:[%s266 + $0x20] sm:$0xf] %v283
                %v285 = vld [vmem:[%s265 + $0x6c] sm:$0xf]
                %286 = vst [vmem:[%s266 + $0x24] sm:$0xf] %v285
                %v287 = vld [vmem:[%s265 + $0x78] sm:$0xf]
                %288 = vst [vmem:[%s266 + $0x28] sm:$0xf] %v287
                %v289 = vld [vmem:[%s265 + $0x84] sm:$0xf]
                %290 = vst [vmem:[%s266 + $0x2c] sm:$0xf] %v289
                %v291 = vld [vmem:[%s265 + $0x90] sm:$0xf]
                %292 = vst [vmem:[%s266 + $0x30] sm:$0xf] %v291
                %v293 = vld [vmem:[%s265 + $0x9c] sm:$0xf]
                %294 = vst [vmem:[%s266 + $0x34] sm:$0xf] %v293
                %v295 = vld [vmem:[%s265 + $0xa8] sm:$0xf]
                %296 = vst [vmem:[%s266 + $0x38] sm:$0xf] %v295
                %v297 = vld [vmem:[%s265 + $0xb4] sm:$0xf]
                %298 = vst [vmem:[%s266 + $0x3c] sm:$0xf] %v297
                %v299 = vld [vmem:[%s265 + $0x180] sm:$0xf]
                %300 = vst [vmem:[%s266 + $0x40] sm:$0xf] %v299
                %v301 = vld [vmem:[%s265 + $0x18c] sm:$0xf]
                %302 = vst [vmem:[%s266 + $0x44] sm:$0xf] %v301
                %v303 = vld [vmem:[%s265 + $0x198] sm:$0xf]
                %304 = vst [vmem:[%s266 + $0x48] sm:$0xf] %v303
                %v305 = vld [vmem:[%s265 + $0x1a4] sm:$0xf]
                %306 = vst [vmem:[%s266 + $0x4c] sm:$0xf] %v305
                %v307 = vld [vmem:[%s265 + $0x1b0] sm:$0xf]
                %308 = vst [vmem:[%s266 + $0x50] sm:$0xf] %v307
                %v309 = vld [vmem:[%s265 + $0x1bc] sm:$0xf]
                %310 = vst [vmem:[%s266 + $0x54] sm:$0xf] %v309
                %v311 = vld [vmem:[%s265 + $0x1c8] sm:$0xf]
                %312 = vst [vmem:[%s266 + $0x58] sm:$0xf] %v311
                %v313 = vld [vmem:[%s265 + $0x1d4] sm:$0xf]
                %314 = vst [vmem:[%s266 + $0x5c] sm:$0xf] %v313
                %v315 = vld [vmem:[%s265 + $0x1e0] sm:$0xf]
                %316 = vst [vmem:[%s266 + $0x60] sm:$0xf] %v315
                %v317 = vld [vmem:[%s265 + $0x1ec] sm:$0xf]
                %318 = vst [vmem:[%s266 + $0x64] sm:$0xf] %v317
                %v319 = vld [vmem:[%s265 + $0x1f8] sm:$0xf]
                %320 = vst [vmem:[%s266 + $0x68] sm:$0xf] %v319
                %v321 = vld [vmem:[%s265 + $0x204] sm:$0xf]
                %322 = vst [vmem:[%s266 + $0x6c] sm:$0xf] %v321
                %v323 = vld [vmem:[%s265 + $0x210] sm:$0xf]
                %324 = vst [vmem:[%s266 + $0x70] sm:$0xf] %v323
                %v325 = vld [vmem:[%s265 + $0x21c] sm:$0xf]
                %326 = vst [vmem:[%s266 + $0x74] sm:$0xf] %v325
                %v327 = vld [vmem:[%s265 + $0x228] sm:$0xf]
                %328 = vst [vmem:[%s266 + $0x78] sm:$0xf] %v327
                %v329 = vld [vmem:[%s265 + $0x234] sm:$0xf]
                %330 = vst [vmem:[%s266 + $0x7c] sm:$0xf] %v329
              $region41: #{forward.1} parent=35 // loop_footer
                %s264 = sadd.s32 1, %s260
              $region42: #{forward.1} parent=35 // loop_footer_branch
                %259 = sbr.rel target = $region38
              $region43: #{forward.1} parent=35 // loop_exit
                _
            $region36: #{forward.1} parent=27 // pred_fallthru
              _
          $region28: #{forward.1} parent=23 // pred_fallthru
            _
          %414 = vnop
        $region24: #{forward.1} parent=15 // pred_fallthru
          _
        // Predicated region
        $region62: #{forward.1} parent=15 // pred_check
          %p415 = pneg %p104
        $region63: #{forward.1} parent=15 // pred_check_branch
          %417 = sbr.rel (%p415) target = $region65
        $region64: #{forward.1} parent=15 // pred_region
          %s418 = sand.u32 %s94, 1
          %s419 = sand.u32 %s94, 1
          %s420 = smul.addr %s419, 64
          %s421 = scalar_lea.vmem [#allocation5], %s420
          %s422 = smul.u32 16, %s24
          %s423 = smul.addr %s422, 3
          %s424 = sadd.s32 %s23, %s423
          %s425 = smul.addr %s424, 4
          %s426 = scalar_lea.vmem %s2, %s425
          // Predicated region
          $region66: #{forward.1} parent=64 // pred_check
            _
          $region67: #{forward.1} parent=64 // pred_check_branch
            %428 = sbr.rel (0) target = $region69
          $region68: #{forward.1} parent=64 // pred_region
            // Predicated region
            $region70: #{forward.1} parent=68 // pred_check
              _
            $region71: #{forward.1} parent=68 // pred_check_branch
              %430 = sbr.rel target = $region73
            $region72: #{forward.1} parent=68 // pred_region
              // Predicated region
              $region85: #{forward.1} parent=72 // pred_check
                _
              $region86: #{forward.1} parent=72 // pred_check_branch
                %475 = sbr.rel (0) target = $region88
              $region87: #{forward.1} parent=72 // pred_region
                loop: start=0, step=1, limit=1
                $region89: #{forward.1} parent=87 // loop_pre_header
                  _
                $region90: #{forward.1} parent=87 // loop_header
                  %s477 = sphi 0, %s481
                  %p478 = scmp.ge.s32.totalorder %s477, 1
                  %s482 = sphi %s426, %s426
                  %s483 = sphi %s421, %s421
                $region91: #{forward.1} parent=87 // loop_header_branch
                  %480 = sbr.rel (%p478) target = $region95
                $region92: #{forward.1} parent=87 // loop_body
                  _
                $region93: #{forward.1} parent=87 // loop_footer
                  %s481 = sadd.s32 1, %s477
                $region94: #{forward.1} parent=87 // loop_footer_branch
                  %476 = sbr.rel target = $region90
                $region95: #{forward.1} parent=87 // loop_exit
                  _
                loop: start=0, step=1, limit=1
                $region96: #{forward.1} parent=87 // loop_pre_header
                  _
                $region97: #{forward.1} parent=87 // loop_header
                  %s486 = sphi 0, %s490
                  %p487 = scmp.ge.s32.totalorder %s486, 1
                  %s491 = sphi %s426, %s426
                  %s492 = sphi %s421, %s421
                $region98: #{forward.1} parent=87 // loop_header_branch
                  %489 = sbr.rel (%p487) target = $region102
                $region99: #{forward.1} parent=87 // loop_body
                  %v493 = vld [vmem:[%s491] sm:$0xf]
                  %494 = vst [vmem:[%s492] sm:$0xf] %v493
                  %v495 = vld [vmem:[%s491 + $0xc] sm:$0xf]
                  %496 = vst [vmem:[%s492 + $0x4] sm:$0xf] %v495
                  %v497 = vld [vmem:[%s491 + $0x18] sm:$0xf]
                  %498 = vst [vmem:[%s492 + $0x8] sm:$0xf] %v497
                  %v499 = vld [vmem:[%s491 + $0x24] sm:$0xf]
                  %500 = vst [vmem:[%s492 + $0xc] sm:$0xf] %v499
                  %v501 = vld [vmem:[%s491 + $0x30] sm:$0xf]
                  %502 = vst [vmem:[%s492 + $0x10] sm:$0xf] %v501
                  %v503 = vld [vmem:[%s491 + $0x3c] sm:$0xf]
                  %504 = vst [vmem:[%s492 + $0x14] sm:$0xf] %v503
                  %v505 = vld [vmem:[%s491 + $0x48] sm:$0xf]
                  %506 = vst [vmem:[%s492 + $0x18] sm:$0xf] %v505
                  %v507 = vld [vmem:[%s491 + $0x54] sm:$0xf]
                  %508 = vst [vmem:[%s492 + $0x1c] sm:$0xf] %v507
                  %v509 = vld [vmem:[%s491 + $0x60] sm:$0xf]
                  %510 = vst [vmem:[%s492 + $0x20] sm:$0xf] %v509
                  %v511 = vld [vmem:[%s491 + $0x6c] sm:$0xf]
                  %512 = vst [vmem:[%s492 + $0x24] sm:$0xf] %v511
                  %v513 = vld [vmem:[%s491 + $0x78] sm:$0xf]
                  %514 = vst [vmem:[%s492 + $0x28] sm:$0xf] %v513
                  %v515 = vld [vmem:[%s491 + $0x84] sm:$0xf]
                  %516 = vst [vmem:[%s492 + $0x2c] sm:$0xf] %v515
                  %v517 = vld [vmem:[%s491 + $0x90] sm:$0xf]
                  %518 = vst [vmem:[%s492 + $0x30] sm:$0xf] %v517
                  %v519 = vld [vmem:[%s491 + $0x9c] sm:$0xf]
                  %520 = vst [vmem:[%s492 + $0x34] sm:$0xf] %v519
                  %v521 = vld [vmem:[%s491 + $0xa8] sm:$0xf]
                  %522 = vst [vmem:[%s492 + $0x38] sm:$0xf] %v521
                  %v523 = vld [vmem:[%s491 + $0xb4] sm:$0xf]
                  %524 = vst [vmem:[%s492 + $0x3c] sm:$0xf] %v523
                $region100: #{forward.1} parent=87 // loop_footer
                  %s490 = sadd.s32 1, %s486
                $region101: #{forward.1} parent=87 // loop_footer_branch
                  %485 = sbr.rel target = $region97
                $region102: #{forward.1} parent=87 // loop_exit
                  _
              $region88: #{forward.1} parent=72 // pred_fallthru
                _
            $region73: #{forward.1} parent=68 // pred_fallthru
              _
            // Predicated region
            $region74: #{forward.1} parent=68 // pred_check
              _
            $region75: #{forward.1} parent=68 // pred_check_branch
              %432 = sbr.rel (0) target = $region77
            $region76: #{forward.1} parent=68 // pred_region
              loop: start=0, step=1, limit=1
              $region78: #{forward.1} parent=76 // loop_pre_header
                _
              $region79: #{forward.1} parent=76 // loop_header
                %s435 = sphi 0, %s439
                %p436 = scmp.ge.s32.totalorder %s435, 1
                %s440 = sphi %s426, %s426
                %s441 = sphi %s421, %s421
              $region80: #{forward.1} parent=76 // loop_header_branch
                %438 = sbr.rel (%p436) target = $region84
              $region81: #{forward.1} parent=76 // loop_body
                %v442 = vld [vmem:[%s440] sm:$0xf]
                %443 = vst [vmem:[%s441] sm:$0xf] %v442
                %v444 = vld [vmem:[%s440 + $0xc] sm:$0xf]
                %445 = vst [vmem:[%s441 + $0x4] sm:$0xf] %v444
                %v446 = vld [vmem:[%s440 + $0x18] sm:$0xf]
                %447 = vst [vmem:[%s441 + $0x8] sm:$0xf] %v446
                %v448 = vld [vmem:[%s440 + $0x24] sm:$0xf]
                %449 = vst [vmem:[%s441 + $0xc] sm:$0xf] %v448
                %v450 = vld [vmem:[%s440 + $0x30] sm:$0xf]
                %451 = vst [vmem:[%s441 + $0x10] sm:$0xf] %v450
                %v452 = vld [vmem:[%s440 + $0x3c] sm:$0xf]
                %453 = vst [vmem:[%s441 + $0x14] sm:$0xf] %v452
                %v454 = vld [vmem:[%s440 + $0x48] sm:$0xf]
                %455 = vst [vmem:[%s441 + $0x18] sm:$0xf] %v454
                %v456 = vld [vmem:[%s440 + $0x54] sm:$0xf]
                %457 = vst [vmem:[%s441 + $0x1c] sm:$0xf] %v456
                %v458 = vld [vmem:[%s440 + $0x60] sm:$0xf]
                %459 = vst [vmem:[%s441 + $0x20] sm:$0xf] %v458
                %v460 = vld [vmem:[%s440 + $0x6c] sm:$0xf]
                %461 = vst [vmem:[%s441 + $0x24] sm:$0xf] %v460
                %v462 = vld [vmem:[%s440 + $0x78] sm:$0xf]
                %463 = vst [vmem:[%s441 + $0x28] sm:$0xf] %v462
                %v464 = vld [vmem:[%s440 + $0x84] sm:$0xf]
                %465 = vst [vmem:[%s441 + $0x2c] sm:$0xf] %v464
                %v466 = vld [vmem:[%s440 + $0x90] sm:$0xf]
                %467 = vst [vmem:[%s441 + $0x30] sm:$0xf] %v466
                %v468 = vld [vmem:[%s440 + $0x9c] sm:$0xf]
                %469 = vst [vmem:[%s441 + $0x34] sm:$0xf] %v468
                %v470 = vld [vmem:[%s440 + $0xa8] sm:$0xf]
                %471 = vst [vmem:[%s441 + $0x38] sm:$0xf] %v470
                %v472 = vld [vmem:[%s440 + $0xb4] sm:$0xf]
                %473 = vst [vmem:[%s441 + $0x3c] sm:$0xf] %v472
              $region82: #{forward.1} parent=76 // loop_footer
                %s439 = sadd.s32 1, %s435
              $region83: #{forward.1} parent=76 // loop_footer_branch
                %434 = sbr.rel target = $region79
              $region84: #{forward.1} parent=76 // loop_exit
                _
            $region77: #{forward.1} parent=68 // pred_fallthru
              _
          $region69: #{forward.1} parent=64 // pred_fallthru
            _
          %525 = vnop
        $region65: #{forward.1} parent=15 // pred_fallthru
          _
        // Predicated region
        $region103: #{forward.1} parent=15 // pred_check
          %p526 = pneg %p130
        $region104: #{forward.1} parent=15 // pred_check_branch
          %528 = sbr.rel (%p526) target = $region106
        $region105: #{forward.1} parent=15 // pred_region
          %s529 = smul.u32 16, %s24
          %p530 = scmp.lt.s32.totalorder %s529, 31
          %s531 = scalar_select %p530, %s529, 31
          %s532 = smul.addr %s531, 8
          %s533 = scalar_lea.vmem %s3, %s532
          %s534 = smul.u32 16, %s24
        $region106: #{forward.1} parent=15 // pred_fallthru
          _
        // Predicated region
        $region107: #{forward.1} parent=15 // pred_check
          %p535 = pneg %p156
        $region108: #{forward.1} parent=15 // pred_check_branch
          %537 = sbr.rel (%p535) target = $region110
        $region109: #{forward.1} parent=15 // pred_region
          %p538 = scmp.lt.s32.totalorder %s23, 2
          %s539 = scalar_select %p538, %s23, 2
          %s540 = smul.addr %s539, 4
          %s541 = scalar_lea.vmem %s4, %s540
        $region110: #{forward.1} parent=15 // pred_fallthru
          _
      $region16: #{forward.1} parent=5 // pred_fallthru
        _
      %p542 = scmp.le.s32.totalorder 1, %s16
      %p543 = scmp.lt.s32.totalorder %s16, 7
      %p544 = pnand %p542, %p543
      %p545 = pneg %p544
      // Predicated region
      $region111: #{forward.1} parent=5 // pred_check
        _
      $region112: #{forward.1} parent=5 // pred_check_branch
        %547 = sbr.rel (%p544) target = $region114
      $region113: #{forward.1} parent=5 // pred_region
        %s548 = ssub.s32 %s16, 1
        %s549 = sand.u32 %s69, 1
        %s550 = sand.u32 %s69, 1
        %s551 = smul.addr %s550, 128
        %s552 = scalar_lea.vmem [#allocation4], %s551
        // Predicated region
        $region115: #{forward.1} parent=113 // pred_check
          %p553 = pneg %p82
        $region116: #{forward.1} parent=113 // pred_check_branch
          %555 = sbr.rel (%p553) target = $region118
        $region117: #{forward.1} parent=113 // pred_region
          _
        $region118: #{forward.1} parent=113 // pred_fallthru
          _
        %s556 = sand.u32 %s97, 1
        %s557 = sand.u32 %s97, 1
        %s558 = smul.addr %s557, 64
        %s559 = scalar_lea.vmem [#allocation5], %s558
        // Predicated region
        $region119: #{forward.1} parent=113 // pred_check
          %p560 = pneg %p110
        $region120: #{forward.1} parent=113 // pred_check_branch
          %562 = sbr.rel (%p560) target = $region122
        $region121: #{forward.1} parent=113 // pred_region
          _
        $region122: #{forward.1} parent=113 // pred_fallthru
          _
        %p563 = scmp.lt.s32.totalorder %s26, 1
        %s564 = scalar_select %p563, %s26, 1
        %s565 = smul.addr %s564, 8
        %s566 = scalar_lea.vmem %s0, %s565
        %p567 = pneg %p54
        %p568 = pneg %p51
        %s569 = sand.u32 %s69, 1
        %s570 = sand.u32 %s69, 1
        %s571 = smul.addr %s570, 128
        %s572 = scalar_lea.vmem [#allocation4], %s571
        %p573 = pneg %p82
        %p574 = pneg %p79
        %s575 = sand.u32 %s97, 1
        %s576 = sand.u32 %s97, 1
        %s577 = smul.addr %s576, 64
        %s578 = scalar_lea.vmem [#allocation5], %s577
        %p579 = pneg %p110
        %p580 = pneg %p107
        %s581 = smul.u32 16, %s26
        %p582 = scmp.lt.s32.totalorder %s581, 31
        %s583 = scalar_select %p582, %s581, 31
        %s584 = smul.addr %s583, 8
        %s585 = scalar_lea.vmem %s3, %s584
        %p586 = pneg %p136
        %p587 = pneg %p133
        %p588 = scmp.lt.s32.totalorder %s25, 2
        %s589 = scalar_select %p588, %s25, 2
        %s590 = smul.addr %s589, 4
        %s591 = scalar_lea.vmem %s4, %s590
        %p592 = pneg %p162
        %p593 = pneg %p159
        %p594 = pneg %p188
        %p595 = pneg %p185
        %s596 = sand.u32 %s175, 1
        %s597 = scalar_lea.sflag [#allocation7], %s596
        %s598 = sand.u32 %s175, 1
        %s599 = smul.addr %s598, 8
        %s600 = scalar_lea.vmem [#allocation6], %s599
        %p601 = pneg %p214
        %p602 = pneg %p211
        %p603 = scmp.lt.s32.totalorder %s25, 2
        %s604 = scalar_select %p603, %s25, 2
        %s605 = smul.addr %s604, 8
        %s606 = scalar_lea.vmem %s6, %s605
        %p607 = scmp.lt.s32.totalorder %s26, 1
        %s608 = scalar_select %p607, %s26, 1
        %s609 = smul.addr %s608, 8
        %s610 = scalar_lea.vmem %s0, %s609
        %s611 = smul.u32 16, %s26
        %s612 = smul.u32 16, %s26
        %s613 = smul.u32 16, %s26
        %p614 = scmp.lt.s32.totalorder %s613, 31
        %s615 = scalar_select %p614, %s613, 31
        %s616 = smul.addr %s615, 8
        %s617 = scalar_lea.vmem %s3, %s616
        %s618 = smul.u32 16, %s26
        %p619 = scmp.lt.s32.totalorder %s25, 2
        %s620 = scalar_select %p619, %s25, 2
        %s621 = smul.addr %s620, 4
        %s622 = scalar_lea.vmem %s4, %s621
        %p623 = scmp.lt.s32.totalorder %s25, 2
        %s624 = scalar_select %p623, %s25, 2
        %s625 = smul.addr %s624, 8
        %s626 = scalar_lea.vmem %s6, %s625
        %p628 = scmp.eq.s32.totalorder %s26, 0
        // Predicated region
        $region123: #{forward.1} parent=113 // pred_check
          %p629 = pneg %p628
        $region124: #{forward.1} parent=113 // pred_check_branch
          %631 = sbr.rel (%p629) target = $region126
        $region125: #{forward.1} parent=113 // pred_region
          %632 = vst [vmem:[#allocation2] sm:$0xff] 0.0
          %633 = vst [vmem:[#allocation3] sm:$0x1] 0.0
        $region126: #{forward.1} parent=113 // pred_fallthru
          _
        %v634 = vld [vmem:[%s552] sm:$0xf]
        %v635 = vld [vmem:[%s552 + $0x4] sm:$0xf]
        %v636 = vld [vmem:[%s552 + $0x8] sm:$0xf]
        %v637 = vld [vmem:[%s552 + $0xc] sm:$0xf]
        %v638 = vld [vmem:[%s552 + $0x10] sm:$0xf]
        %v639 = vld [vmem:[%s552 + $0x14] sm:$0xf]
        %v640 = vld [vmem:[%s552 + $0x18] sm:$0xf]
        %v641 = vld [vmem:[%s552 + $0x1c] sm:$0xf]
        %v642 = vld [vmem:[%s552 + $0x20] sm:$0xf]
        %v643 = vld [vmem:[%s552 + $0x24] sm:$0xf]
        %v644 = vld [vmem:[%s552 + $0x28] sm:$0xf]
        %v645 = vld [vmem:[%s552 + $0x2c] sm:$0xf]
        %v646 = vld [vmem:[%s552 + $0x30] sm:$0xf]
        %v647 = vld [vmem:[%s552 + $0x34] sm:$0xf]
        %v648 = vld [vmem:[%s552 + $0x38] sm:$0xf]
        %v649 = vld [vmem:[%s552 + $0x3c] sm:$0xf]
        %v650 = vunpack.c.l.bf16 %v634
        %v651 = vunpack.c.l.bf16 %v635
        %v652 = vunpack.c.l.bf16 %v636
        %v653 = vunpack.c.l.bf16 %v637
        %v654 = vunpack.c.l.bf16 %v638
        %v655 = vunpack.c.l.bf16 %v639
        %v656 = vunpack.c.l.bf16 %v640
        %v657 = vunpack.c.l.bf16 %v641
        %v658 = vunpack.c.l.bf16 %v642
        %v659 = vunpack.c.l.bf16 %v643
        %v660 = vunpack.c.l.bf16 %v644
        %v661 = vunpack.c.l.bf16 %v645
        %v662 = vunpack.c.l.bf16 %v646
        %v663 = vunpack.c.l.bf16 %v647
        %v664 = vunpack.c.l.bf16 %v648
        %v665 = vunpack.c.l.bf16 %v649
        %s666 = scalar_lea.vmem %s552, 64 [#allocation4]
        %v667 = vld [vmem:[%s666] sm:$0xf]
        %v668 = vld [vmem:[%s666 + $0x4] sm:$0xf]
        %v669 = vld [vmem:[%s666 + $0x8] sm:$0xf]
        %v670 = vld [vmem:[%s666 + $0xc] sm:$0xf]
        %v671 = vld [vmem:[%s666 + $0x10] sm:$0xf]
        %v672 = vld [vmem:[%s666 + $0x14] sm:$0xf]
        %v673 = vld [vmem:[%s666 + $0x18] sm:$0xf]
        %v674 = vld [vmem:[%s666 + $0x1c] sm:$0xf]
        %v675 = vld [vmem:[%s666 + $0x20] sm:$0xf]
        %v676 = vld [vmem:[%s666 + $0x24] sm:$0xf]
        %v677 = vld [vmem:[%s666 + $0x28] sm:$0xf]
        %v678 = vld [vmem:[%s666 + $0x2c] sm:$0xf]
        %v679 = vld [vmem:[%s666 + $0x30] sm:$0xf]
        %v680 = vld [vmem:[%s666 + $0x34] sm:$0xf]
        %v681 = vld [vmem:[%s666 + $0x38] sm:$0xf]
        %v682 = vld [vmem:[%s666 + $0x3c] sm:$0xf]
        %v683 = vunpack.c.l.bf16 %v667
        %v684 = vunpack.c.l.bf16 %v668
        %v685 = vunpack.c.l.bf16 %v669
        %v686 = vunpack.c.l.bf16 %v670
        %v687 = vunpack.c.l.bf16 %v671
        %v688 = vunpack.c.l.bf16 %v672
        %v689 = vunpack.c.l.bf16 %v673
        %v690 = vunpack.c.l.bf16 %v674
        %v691 = vunpack.c.l.bf16 %v675
        %v692 = vunpack.c.l.bf16 %v676
        %v693 = vunpack.c.l.bf16 %v677
        %v694 = vunpack.c.l.bf16 %v678
        %v695 = vunpack.c.l.bf16 %v679
        %v696 = vunpack.c.l.bf16 %v680
        %v697 = vunpack.c.l.bf16 %v681
        %v698 = vunpack.c.l.bf16 %v682
        %v699 = vld [vmem:[%s559] sm:$0xf]
        %v700 = vld [vmem:[%s559 + $0x4] sm:$0xf]
        %v701 = vld [vmem:[%s559 + $0x8] sm:$0xf]
        %v702 = vld [vmem:[%s559 + $0xc] sm:$0xf]
        %v703 = vld [vmem:[%s559 + $0x10] sm:$0xf]
        %v704 = vld [vmem:[%s559 + $0x14] sm:$0xf]
        %v705 = vld [vmem:[%s559 + $0x18] sm:$0xf]
        %v706 = vld [vmem:[%s559 + $0x1c] sm:$0xf]
        %v707 = vld [vmem:[%s559 + $0x20] sm:$0xf]
        %v708 = vld [vmem:[%s559 + $0x24] sm:$0xf]
        %v709 = vld [vmem:[%s559 + $0x28] sm:$0xf]
        %v710 = vld [vmem:[%s559 + $0x2c] sm:$0xf]
        %v711 = vld [vmem:[%s559 + $0x30] sm:$0xf]
        %v712 = vld [vmem:[%s559 + $0x34] sm:$0xf]
        %v713 = vld [vmem:[%s559 + $0x38] sm:$0xf]
        %v714 = vld [vmem:[%s559 + $0x3c] sm:$0xf]
        %v715 = vunpack.c.l.bf16 %v699
        %v716 = vunpack.c.l.bf16 %v700
        %v717 = vunpack.c.l.bf16 %v701
        %v718 = vunpack.c.l.bf16 %v702
        %v719 = vunpack.c.l.bf16 %v703
        %v720 = vunpack.c.l.bf16 %v704
        %v721 = vunpack.c.l.bf16 %v705
        %v722 = vunpack.c.l.bf16 %v706
        %v723 = vunpack.c.l.bf16 %v707
        %v724 = vunpack.c.l.bf16 %v708
        %v725 = vunpack.c.l.bf16 %v709
        %v726 = vunpack.c.l.bf16 %v710
        %v727 = vunpack.c.l.bf16 %v711
        %v728 = vunpack.c.l.bf16 %v712
        %v729 = vunpack.c.l.bf16 %v713
        %v730 = vunpack.c.l.bf16 %v714
        %v731 = vmax.f32 %v683, 0.0
        %v732 = vmax.f32 %v684, 0.0
        %v733 = vmax.f32 %v685, 0.0
        %v734 = vmax.f32 %v686, 0.0
        %v735 = vmax.f32 %v687, 0.0
        %v736 = vmax.f32 %v688, 0.0
        %v737 = vmax.f32 %v689, 0.0
        %v738 = vmax.f32 %v690, 0.0
        %v739 = vmax.f32 %v691, 0.0
        %v740 = vmax.f32 %v692, 0.0
        %v741 = vmax.f32 %v693, 0.0
        %v742 = vmax.f32 %v694, 0.0
        %v743 = vmax.f32 %v695, 0.0
        %v744 = vmax.f32 %v696, 0.0
        %v745 = vmax.f32 %v697, 0.0
        %v746 = vmax.f32 %v698, 0.0
        %v747 = vand.u32 2147483647, %v683
        %v748 = vand.u32 2147483647, %v684
        %v749 = vand.u32 2147483647, %v685
        %v750 = vand.u32 2147483647, %v686
        %v751 = vand.u32 2147483647, %v687
        %v752 = vand.u32 2147483647, %v688
        %v753 = vand.u32 2147483647, %v689
        %v754 = vand.u32 2147483647, %v690
        %v755 = vand.u32 2147483647, %v691
        %v756 = vand.u32 2147483647, %v692
        %v757 = vand.u32 2147483647, %v693
        %v758 = vand.u32 2147483647, %v694
        %v759 = vand.u32 2147483647, %v695
        %v760 = vand.u32 2147483647, %v696
        %v761 = vand.u32 2147483647, %v697
        %v762 = vand.u32 2147483647, %v698
        %v763 = vsub.f32 0.0, %v747
        %v764 = vsub.f32 0.0, %v748
        %v765 = vsub.f32 0.0, %v749
        %v766 = vsub.f32 0.0, %v750
        %v767 = vsub.f32 0.0, %v751
        %v768 = vsub.f32 0.0, %v752
        %v769 = vsub.f32 0.0, %v753
        %v770 = vsub.f32 0.0, %v754
        %v771 = vsub.f32 0.0, %v755
        %v772 = vsub.f32 0.0, %v756
        %v773 = vsub.f32 0.0, %v757
        %v774 = vsub.f32 0.0, %v758
        %v775 = vsub.f32 0.0, %v759
        %v776 = vsub.f32 0.0, %v760
        %v777 = vsub.f32 0.0, %v761
        %v778 = vsub.f32 0.0, %v762
        %v779 = vmul.f32 %v763, 1.442695
        %v780 = vpow.pop %v779
        %v781 = vmul.f32 %v764, 1.442695
        %v782 = vpow.pop %v781
        %v783 = vmul.f32 %v765, 1.442695
        %v784 = vpow.pop %v783
        %v785 = vmul.f32 %v766, 1.442695
        %v786 = vpow.pop %v785
        %v787 = vmul.f32 %v767, 1.442695
        %v788 = vpow.pop %v787
        %v789 = vmul.f32 %v768, 1.442695
        %v790 = vpow.pop %v789
        %v791 = vmul.f32 %v769, 1.442695
        %v792 = vpow.pop %v791
        %v793 = vmul.f32 %v770, 1.442695
        %v794 = vpow.pop %v793
        %v795 = vmul.f32 %v771, 1.442695
        %v796 = vpow.pop %v795
        %v797 = vmul.f32 %v772, 1.442695
        %v798 = vpow.pop %v797
        %v799 = vmul.f32 %v773, 1.442695
        %v800 = vpow.pop %v799
        %v801 = vmul.f32 %v774, 1.442695
        %v802 = vpow.pop %v801
        %v803 = vmul.f32 %v775, 1.442695
        %v804 = vpow.pop %v803
        %v805 = vmul.f32 %v776, 1.442695
        %v806 = vpow.pop %v805
        %v807 = vmul.f32 %v777, 1.442695
        %v808 = vpow.pop %v807
        %v809 = vmul.f32 %v778, 1.442695
        %v810 = vpow.pop %v809
        %v811 = vadd.f32 %v780, 1.0
        %v812 = vadd.f32 %v782, 1.0
        %v813 = vadd.f32 %v784, 1.0
        %v814 = vadd.f32 %v786, 1.0
        %v815 = vadd.f32 %v788, 1.0
        %v816 = vadd.f32 %v790, 1.0
        %v817 = vadd.f32 %v792, 1.0
        %v818 = vadd.f32 %v794, 1.0
        %v819 = vadd.f32 %v796, 1.0
        %v820 = vadd.f32 %v798, 1.0
        %v821 = vadd.f32 %v800, 1.0
        %v822 = vadd.f32 %v802, 1.0
        %v823 = vadd.f32 %v804, 1.0
        %v824 = vadd.f32 %v806, 1.0
        %v825 = vadd.f32 %v808, 1.0
        %v826 = vadd.f32 %v810, 1.0
        %v827 = vlog2.pop %v811
        %v828 = vmul.f32 %v827, 0.6931472
        %v829 = vlog2.pop %v812
        %v830 = vmul.f32 %v829, 0.6931472
        %v831 = vlog2.pop %v813
        %v832 = vmul.f32 %v831, 0.6931472
        %v833 = vlog2.pop %v814
        %v834 = vmul.f32 %v833, 0.6931472
        %v835 = vlog2.pop %v815
        %v836 = vmul.f32 %v835, 0.6931472
        %v837 = vlog2.pop %v816
        %v838 = vmul.f32 %v837, 0.6931472
        %v839 = vlog2.pop %v817
        %v840 = vmul.f32 %v839, 0.6931472
        %v841 = vlog2.pop %v818
        %v842 = vmul.f32 %v841, 0.6931472
        %v843 = vlog2.pop %v819
        %v844 = vmul.f32 %v843, 0.6931472
        %v845 = vlog2.pop %v820
        %v846 = vmul.f32 %v845, 0.6931472
        %v847 = vlog2.pop %v821
        %v848 = vmul.f32 %v847, 0.6931472
        %v849 = vlog2.pop %v822
        %v850 = vmul.f32 %v849, 0.6931472
        %v851 = vlog2.pop %v823
        %v852 = vmul.f32 %v851, 0.6931472
        %v853 = vlog2.pop %v824
        %v854 = vmul.f32 %v853, 0.6931472
        %v855 = vlog2.pop %v825
        %v856 = vmul.f32 %v855, 0.6931472
        %v857 = vlog2.pop %v826
        %v858 = vmul.f32 %v857, 0.6931472
        %v859 = vadd.f32 %v731, %v828
        %v860 = vadd.f32 %v732, %v830
        %v861 = vadd.f32 %v733, %v832
        %v862 = vadd.f32 %v734, %v834
        %v863 = vadd.f32 %v735, %v836
        %v864 = vadd.f32 %v736, %v838
        %v865 = vadd.f32 %v737, %v840
        %v866 = vadd.f32 %v738, %v842
        %v867 = vadd.f32 %v739, %v844
        %v868 = vadd.f32 %v740, %v846
        %v869 = vadd.f32 %v741, %v848
        %v870 = vadd.f32 %v742, %v850
        %v871 = vadd.f32 %v743, %v852
        %v872 = vadd.f32 %v744, %v854
        %v873 = vadd.f32 %v745, %v856
        %v874 = vadd.f32 %v746, %v858
        %v875 = vld [vmem:[%s617] sm:$0xff]
        %v876 = vld [vmem:[%s617 + $0x8] sm:$0xff]
        %v877 = vld [vmem:[%s617 + $0x10] sm:$0xff]
        %v878 = vld [vmem:[%s617 + $0x18] sm:$0xff]
        %v879 = vld [vmem:[%s617 + $0x20] sm:$0xff]
        %v880 = vld [vmem:[%s617 + $0x28] sm:$0xff]
        %v881 = vld [vmem:[%s617 + $0x30] sm:$0xff]
        %v882 = vld [vmem:[%s617 + $0x38] sm:$0xff]
        %v883 = vld [vmem:[%s617 + $0x40] sm:$0xff]
        %v884 = vld [vmem:[%s617 + $0x48] sm:$0xff]
        %v885 = vld [vmem:[%s617 + $0x50] sm:$0xff]
        %v886 = vld [vmem:[%s617 + $0x58] sm:$0xff]
        %v887 = vld [vmem:[%s617 + $0x60] sm:$0xff]
        %v888 = vld [vmem:[%s617 + $0x68] sm:$0xff]
        %v889 = vld [vmem:[%s617 + $0x70] sm:$0xff]
        %v890 = vld [vmem:[%s617 + $0x78] sm:$0xff]
        %892 = vset.pattern.permute.xlu0 0
        %893 = vperm.xlu0 %892, %v875
        %v894 = vpop.permute.xlu0 %893
        %897 = vset.pattern.permute.xlu0 0
        %898 = vperm.xlu0 %897, %v876
        %v899 = vpop.permute.xlu0 %898
        %902 = vset.pattern.permute.xlu0 0
        %903 = vperm.xlu0 %902, %v877
        %v904 = vpop.permute.xlu0 %903
        %907 = vset.pattern.permute.xlu0 0
        %908 = vperm.xlu0 %907, %v878
        %v909 = vpop.permute.xlu0 %908
        %912 = vset.pattern.permute.xlu0 0
        %913 = vperm.xlu0 %912, %v879
        %v914 = vpop.permute.xlu0 %913
        %917 = vset.pattern.permute.xlu0 0
        %918 = vperm.xlu0 %917, %v880
        %v919 = vpop.permute.xlu0 %918
        %922 = vset.pattern.permute.xlu0 0
        %923 = vperm.xlu0 %922, %v881
        %v924 = vpop.permute.xlu0 %923
        %927 = vset.pattern.permute.xlu0 0
        %928 = vperm.xlu0 %927, %v882
        %v929 = vpop.permute.xlu0 %928
        %932 = vset.pattern.permute.xlu0 0
        %933 = vperm.xlu0 %932, %v883
        %v934 = vpop.permute.xlu0 %933
        %937 = vset.pattern.permute.xlu0 0
        %938 = vperm.xlu0 %937, %v884
        %v939 = vpop.permute.xlu0 %938
        %942 = vset.pattern.permute.xlu0 0
        %943 = vperm.xlu0 %942, %v885
        %v944 = vpop.permute.xlu0 %943
        %947 = vset.pattern.permute.xlu0 0
        %948 = vperm.xlu0 %947, %v886
        %v949 = vpop.permute.xlu0 %948
        %952 = vset.pattern.permute.xlu0 0
        %953 = vperm.xlu0 %952, %v887
        %v954 = vpop.permute.xlu0 %953
        %957 = vset.pattern.permute.xlu0 0
        %958 = vperm.xlu0 %957, %v888
        %v959 = vpop.permute.xlu0 %958
        %962 = vset.pattern.permute.xlu0 0
        %963 = vperm.xlu0 %962, %v889
        %v964 = vpop.permute.xlu0 %963
        %967 = vset.pattern.permute.xlu0 0
        %968 = vperm.xlu0 %967, %v890
        %v969 = vpop.permute.xlu0 %968
        %v971 = vmul.f32 %v715, %v894
        %v972 = vmul.f32 %v716, %v899
        %v973 = vmul.f32 %v717, %v904
        %v974 = vmul.f32 %v718, %v909
        %v975 = vmul.f32 %v719, %v914
        %v976 = vmul.f32 %v720, %v919
        %v977 = vmul.f32 %v721, %v924
        %v978 = vmul.f32 %v722, %v929
        %v979 = vmul.f32 %v723, %v934
        %v980 = vmul.f32 %v724, %v939
        %v981 = vmul.f32 %v725, %v944
        %v982 = vmul.f32 %v726, %v949
        %v983 = vmul.f32 %v727, %v954
        %v984 = vmul.f32 %v728, %v959
        %v985 = vmul.f32 %v729, %v964
        %v986 = vmul.f32 %v730, %v969
        %v987 = vmul.f32 %v859, %v971
        %v988 = vmul.f32 %v860, %v972
        %v989 = vmul.f32 %v861, %v973
        %v990 = vmul.f32 %v862, %v974
        %v991 = vmul.f32 %v863, %v975
        %v992 = vmul.f32 %v864, %v976
        %v993 = vmul.f32 %v865, %v977
        %v994 = vmul.f32 %v866, %v978
        %v995 = vmul.f32 %v867, %v979
        %v996 = vmul.f32 %v868, %v980
        %v997 = vmul.f32 %v869, %v981
        %v998 = vmul.f32 %v870, %v982
        %v999 = vmul.f32 %v871, %v983
        %v1000 = vmul.f32 %v872, %v984
        %v1001 = vmul.f32 %v873, %v985
        %v1002 = vmul.f32 %v874, %v986
        %v1003 = vadd.f32 %v650, %v987
        %v1004 = vadd.f32 %v651, %v988
        %v1005 = vadd.f32 %v652, %v989
        %v1006 = vadd.f32 %v653, %v990
        %v1007 = vadd.f32 %v654, %v991
        %v1008 = vadd.f32 %v655, %v992
        %v1009 = vadd.f32 %v656, %v993
        %v1010 = vadd.f32 %v657, %v994
        %v1011 = vadd.f32 %v658, %v995
        %v1012 = vadd.f32 %v659, %v996
        %v1013 = vadd.f32 %v660, %v997
        %v1014 = vadd.f32 %v661, %v998
        %v1015 = vadd.f32 %v662, %v999
        %v1016 = vadd.f32 %v663, %v1000
        %v1017 = vadd.f32 %v664, %v1001
        %v1018 = vadd.f32 %v665, %v1002
        %v1019 = vld [vmem:[#allocation2] sm:$0xff]
        %v1020 = vld [vmem:[%s610] sm:$0xff]
        %v1021 = vpack.c.bf16 %v1020, %v1020
        %v1022 = vpack.c.bf16 %v1004, %v1003
        %v1023 = vpack.c.bf16 %v1006, %v1005
        %v1024 = vpack.c.bf16 %v1008, %v1007
        %v1025 = vpack.c.bf16 %v1010, %v1009
        %v1026 = vpack.c.bf16 %v1012, %v1011
        %v1027 = vpack.c.bf16 %v1014, %v1013
        %v1028 = vpack.c.bf16 %v1016, %v1015
        %v1029 = vpack.c.bf16 %v1018, %v1017
        %1030 = vmatprep.subr.bf16.mxu0 0
        %1031 = vmatpush1.bf16.msra.mxu0 %v1022
        %1032 = vmatprep.subr.bf16.mxu0 0
        %1033 = vmatpush1.bf16.msra.mxu0 %v1023
        %1034 = vmatprep.subr.bf16.mxu0 0
        %1035 = vmatpush1.bf16.msra.mxu0 %v1024
        %1036 = vmatprep.subr.bf16.mxu0 0
        %1037 = vmatpush1.bf16.msra.mxu0 %v1025
        %1038 = vmatprep.subr.bf16.mxu0 0
        %1039 = vmatpush1.bf16.msra.mxu0 %v1026
        %1040 = vmatprep.subr.bf16.mxu0 0
        %1041 = vmatpush1.bf16.msra.mxu0 %v1027
        %1042 = vmatprep.subr.bf16.mxu0 0
        %1043 = vmatpush1.bf16.msra.mxu0 %v1028
        %1044 = vmatprep.subr.bf16.mxu0 0
        %1045 = vmatpush1.bf16.msra.mxu0 %v1029
        %1046 = vmatprep.subr.bf16.mxu0 0
        %1047 = vmatpush1.bf16.msra.mxu0 0
        %1048 = vmatprep.subr.bf16.mxu0 0
        %1049 = vmatpush1.bf16.msra.mxu0 0
        %1050 = vmatprep.subr.bf16.mxu0 0
        %1051 = vmatpush1.bf16.msra.mxu0 0
        %1052 = vmatprep.subr.bf16.mxu0 0
        %1053 = vmatpush1.bf16.msra.mxu0 0
        %1054 = vmatprep.subr.bf16.mxu0 0
        %1055 = vmatpush1.bf16.msra.mxu0 0
        %1056 = vmatprep.subr.bf16.mxu0 0
        %1057 = vmatpush1.bf16.msra.mxu0 0
        %1058 = vmatprep.subr.bf16.mxu0 0
        %1059 = vmatpush1.bf16.msra.mxu0 0
        %1060 = vmatprep.subr.bf16.mxu0 0
        %1061 = vmatpush1.bf16.msra.mxu0 0
        %1062 = vmatprep.mubr.bf16.mxu0 0
        %1063 = vmatmul.mubr.bf16.gmra.mrb[0].mxu0 %v1021
        %v1064 = vpop.f32.mrb[0].mxu0
        %v1065 = vadd.f32 0.0, %v1064
        %v1066 = vpop.f32.mrb[0].mxu0
        %v1067 = vpop.f32.mrb[0].mxu0
        %v1068 = vpop.f32.mrb[0].mxu0
        %1069 = vdwg.mxu0
        %v1070 = vadd.f32 %v1019, %v1065
        %1071 = vst [vmem:[#allocation2] sm:$0xff] %v1070
        %v1072 = vld [vmem:[#allocation3] sm:$0x1]
        %v1073 = vmul.f32 %v1003, 0.5
        %v1074 = vmul.f32 %v1004, 0.5
        %v1075 = vmul.f32 %v1005, 0.5
        %v1076 = vmul.f32 %v1006, 0.5
        %v1077 = vmul.f32 %v1007, 0.5
        %v1078 = vmul.f32 %v1008, 0.5
        %v1079 = vmul.f32 %v1009, 0.5
        %v1080 = vmul.f32 %v1010, 0.5
        %v1081 = vmul.f32 %v1011, 0.5
        %v1082 = vmul.f32 %v1012, 0.5
        %v1083 = vmul.f32 %v1013, 0.5
        %v1084 = vmul.f32 %v1014, 0.5
        %v1085 = vmul.f32 %v1015, 0.5
        %v1086 = vmul.f32 %v1016, 0.5
        %v1087 = vmul.f32 %v1017, 0.5
        %v1088 = vmul.f32 %v1018, 0.5
        %v1089 = vmul.f32 %v1073, %v1003
        %v1090 = vmul.f32 %v1074, %v1004
        %v1091 = vmul.f32 %v1075, %v1005
        %v1092 = vmul.f32 %v1076, %v1006
        %v1093 = vmul.f32 %v1077, %v1007
        %v1094 = vmul.f32 %v1078, %v1008
        %v1095 = vmul.f32 %v1079, %v1009
        %v1096 = vmul.f32 %v1080, %v1010
        %v1097 = vmul.f32 %v1081, %v1011
        %v1098 = vmul.f32 %v1082, %v1012
        %v1099 = vmul.f32 %v1083, %v1013
        %v1100 = vmul.f32 %v1084, %v1014
        %v1101 = vmul.f32 %v1085, %v1015
        %v1102 = vmul.f32 %v1086, %v1016
        %v1103 = vmul.f32 %v1087, %v1017
        %v1104 = vmul.f32 %v1088, %v1018
        %v1105 = vlog2.pop %v859
        %v1106 = vmul.f32 %v1105, 0.6931472
        %v1107 = vlog2.pop %v860
        %v1108 = vmul.f32 %v1107, 0.6931472
        %v1109 = vlog2.pop %v861
        %v1110 = vmul.f32 %v1109, 0.6931472
        %v1111 = vlog2.pop %v862
        %v1112 = vmul.f32 %v1111, 0.6931472
        %v1113 = vlog2.pop %v863
        %v1114 = vmul.f32 %v1113, 0.6931472
        %v1115 = vlog2.pop %v864
        %v1116 = vmul.f32 %v1115, 0.6931472
        %v1117 = vlog2.pop %v865
        %v1118 = vmul.f32 %v1117, 0.6931472
        %v1119 = vlog2.pop %v866
        %v1120 = vmul.f32 %v1119, 0.6931472
        %v1121 = vlog2.pop %v867
        %v1122 = vmul.f32 %v1121, 0.6931472
        %v1123 = vlog2.pop %v868
        %v1124 = vmul.f32 %v1123, 0.6931472
        %v1125 = vlog2.pop %v869
        %v1126 = vmul.f32 %v1125, 0.6931472
        %v1127 = vlog2.pop %v870
        %v1128 = vmul.f32 %v1127, 0.6931472
        %v1129 = vlog2.pop %v871
        %v1130 = vmul.f32 %v1129, 0.6931472
        %v1131 = vlog2.pop %v872
        %v1132 = vmul.f32 %v1131, 0.6931472
        %v1133 = vlog2.pop %v873
        %v1134 = vmul.f32 %v1133, 0.6931472
        %v1135 = vlog2.pop %v874
        %v1136 = vmul.f32 %v1135, 0.6931472
        %v1137 = vsub.f32 %v1089, %v1106
        %v1138 = vsub.f32 %v1090, %v1108
        %v1139 = vsub.f32 %v1091, %v1110
        %v1140 = vsub.f32 %v1092, %v1112
        %v1141 = vsub.f32 %v1093, %v1114
        %v1142 = vsub.f32 %v1094, %v1116
        %v1143 = vsub.f32 %v1095, %v1118
        %v1144 = vsub.f32 %v1096, %v1120
        %v1145 = vsub.f32 %v1097, %v1122
        %v1146 = vsub.f32 %v1098, %v1124
        %v1147 = vsub.f32 %v1099, %v1126
        %v1148 = vsub.f32 %v1100, %v1128
        %v1149 = vsub.f32 %v1101, %v1130
        %v1150 = vsub.f32 %v1102, %v1132
        %v1151 = vsub.f32 %v1103, %v1134
        %v1152 = vsub.f32 %v1104, %v1136
        %v1153 = vadd.f32 %v1137, %v1138
        %v1154 = vadd.f32 %v1153, %v1139
        %v1155 = vadd.f32 %v1154, %v1140
        %v1156 = vadd.f32 %v1155, %v1141
        %v1157 = vadd.f32 %v1156, %v1142
        %v1158 = vadd.f32 %v1157, %v1143
        %v1159 = vadd.f32 %v1158, %v1144
        %v1160 = vadd.f32 %v1159, %v1145
        %v1161 = vadd.f32 %v1160, %v1146
        %v1162 = vadd.f32 %v1161, %v1147
        %v1163 = vadd.f32 %v1162, %v1148
        %v1164 = vadd.f32 %v1163, %v1149
        %v1165 = vadd.f32 %v1164, %v1150
        %v1166 = vadd.f32 %v1165, %v1151
        %v1167 = vadd.f32 %v1166, %v1152
        %v1168 = vrot.slane %v1167, 4
        %v1169 = vadd.f32 %v1167, %v1168
        %v1170 = vrot.slane %v1169, 2
        %v1171 = vadd.f32 %v1169, %v1170
        %v1172 = vrot.slane %v1171, 1
        %v1173 = vadd.f32 %v1171, %v1172
        %v1174 = vadd.f32 %v1072, %v1173
        %1175 = vst [vmem:[#allocation3] sm:$0x1] %v1174
        %p1176 = scmp.eq.s32.totalorder %s26, 1
        // Predicated region
        $region127: #{forward.1} parent=113 // pred_check
          %p1177 = pneg %p1176
        $region128: #{forward.1} parent=113 // pred_check_branch
          %1179 = sbr.rel (%p1177) target = $region130
        $region129: #{forward.1} parent=113 // pred_region
          %v1180 = vld [vmem:[%s622] sm:$0x1]
          %v1181 = vld [vmem:[%s622 + $0x1] sm:$0x1]
          %v1182 = vld [vmem:[%s622 + $0x2] sm:$0x1]
          %v1183 = vmax.f32 %v1181, 0.0
          %v1184 = vand.u32 2147483647, %v1181
          %v1185 = vsub.f32 0.0, %v1184
          %v1186 = vmul.f32 %v1185, 1.442695
          %v1187 = vpow.pop %v1186
          %v1188 = vadd.f32 %v1187, 1.0
          %v1189 = vlog2.pop %v1188
          %v1190 = vmul.f32 %v1189, 0.6931472
          %v1191 = vadd.f32 %v1183, %v1190
          %v1192 = vmul.f32 %v1191, %v1182
          %v1193 = vadd.f32 %v1180, %v1192
          %v1194 = vld [vmem:[#allocation2] sm:$0xff]
          %v1195 = vlaneseq
          %v1196 = vshrl.u32 %v1195, 7
          %v1197 = vsub.s32 0, %v1196
          %v1198 = vrot.slane %v1193, %v1197
          %v1199 = vadd.f32 %v1194, %v1198
          %1200 = vst [vmem:[%s600] sm:$0xff] %v1199
          %v1201 = vld [vmem:[#allocation3] sm:$0x1]
          %v1202 = vmul.f32 %v1193, 0.5
          %v1203 = vmul.f32 %v1202, %v1193
          %v1204 = vadd.f32 %v1201, %v1203
          %v1205 = vlog2.pop %v1191
          %v1206 = vmul.f32 %v1205, 0.6931472
          %v1207 = vsub.f32 %v1204, %v1206
          %vm1208 = vcmask 1040384
          %v1209 = vsel %vm1208, %v1207, 0.0
          %1210 = vadd.xlane.f32.xlu0 %v1209
          %v1211 = vpop.xlane.xlu0 %1210
          %v1212 = vrot.slane %v1211, 4
          %v1213 = vadd.f32 %v1211, %v1212
          %v1214 = vrot.slane %v1213, 2
          %v1215 = vadd.f32 %v1213, %v1214
          %v1216 = vrot.slane %v1215, 1
          %v1217 = vadd.f32 %v1215, %v1216
          %s1218 = vtos %v1217
          %v1219 = vstv %s1218
          %1220 = vst [vmem:[%s626] sm:$0xff] %v1219
        $region130: #{forward.1} parent=113 // pred_fallthru
          _
        %s1221 = sand.u32 %s175, 1
        %s1222 = scalar_lea.sflag [#allocation7], %s1221
        %s1223 = sand.u32 %s175, 1
        %s1224 = smul.addr %s1223, 8
        %s1225 = scalar_lea.vmem [#allocation6], %s1224
        %p1226 = scmp.lt.s32.totalorder %s25, 2
        %s1227 = scalar_select %p1226, %s25, 2
        %s1228 = smul.addr %s1227, 8
        %s1229 = scalar_lea.vmem %s6, %s1228
        // Predicated region
        $region131: #{forward.1} parent=113 // pred_check
          %p1230 = pneg %p185
        $region132: #{forward.1} parent=113 // pred_check_branch
          %1232 = sbr.rel (%p1230) target = $region134
        $region133: #{forward.1} parent=113 // pred_region
          %s1234 = ssub.s32 128, 128
          %1235 = vsyncadd %s1222, %s1234
          %s1236 = smul.addr %s25, 128
          %s1237 = scalar_lea.hbm %s5, %s1236
          %s1239 = sshll.u32 %s1225, 4
          %s1240 = int_to_ptr.vmem [resolvable:$true] %s1239
          %1242 = dma.vmem_to_hbm [thread:$0]  %s1240, 128, %s1237, %s1222
        $region134: #{forward.1} parent=113 // pred_fallthru
          _
        // Predicated region
        $region135: #{forward.1} parent=113 // pred_check
          %p1243 = pneg %p211
        $region136: #{forward.1} parent=113 // pred_check_branch
          %1245 = sbr.rel (%p1243) target = $region138
        $region137: #{forward.1} parent=113 // pred_region
          _
        $region138: #{forward.1} parent=113 // pred_fallthru
          _
      $region114: #{forward.1} parent=5 // pred_fallthru
        _
      %p1246 = scmp.le.s32.totalorder 2, %s16
      // Predicated region
      $region139: #{forward.1} parent=5 // pred_check
        %p1247 = pneg %p1246
      $region140: #{forward.1} parent=5 // pred_check_branch
        %1249 = sbr.rel (%p1247) target = $region142
      $region141: #{forward.1} parent=5 // pred_region
        %s1250 = ssub.s32 %s16, 2
        // Predicated region
        $region143: #{forward.1} parent=141 // pred_check
          %p1251 = pneg %p191
        $region144: #{forward.1} parent=141 // pred_check_branch
          %1253 = sbr.rel (%p1251) target = $region146
        $region145: #{forward.1} parent=141 // pred_region
          %s1254 = sand.u32 %s176, 1
          %s1255 = scalar_lea.sflag [#allocation7], %s1254
          %s1256 = sand.u32 %s176, 1
          %s1257 = smul.addr %s1256, 8
          %s1258 = scalar_lea.vmem [#allocation6], %s1257
          %1259 = dma.done %s1255, 128
        $region146: #{forward.1} parent=141 // pred_fallthru
          _
        // Predicated region
        $region147: #{forward.1} parent=141 // pred_check
          %p1260 = pneg %p217
        $region148: #{forward.1} parent=141 // pred_check_branch
          %1262 = sbr.rel (%p1260) target = $region150
        $region149: #{forward.1} parent=141 // pred_region
          %p1263 = scmp.lt.s32.totalorder %s27, 2
          %s1264 = scalar_select %p1263, %s27, 2
          %s1265 = smul.addr %s1264, 8
          %s1266 = scalar_lea.vmem %s6, %s1265
        $region150: #{forward.1} parent=141 // pred_fallthru
          _
      $region142: #{forward.1} parent=5 // pred_fallthru
        _
    $region6: #{forward.1} parent=1 // loop_footer
      %s20 = sadd.s32 1, %s16
    $region7: #{forward.1} parent=1 // loop_footer_branch
      %15 = sbr.rel target = $region3
    $region8: #{forward.1} parent=1 // loop_exit
      _
    %1267 = vsyncpa [#allocation7], 1
    %s1268 = scalar_lea.sflag [#allocation7], 1
    %1269 = vsyncpa %s1268, 1

</llo_original>
